<compile_context>
chip_gen: v7x
topology: tpu7x:2x2x1
jax: 0.10.0
libtpu: 0.0.40
codegen_flags: <defaults>
</compile_context>

<pallas_src>
import math

import jax
import jax.numpy as jnp
from jax.experimental import pallas as pl
from jax.experimental.pallas import tpu as pltpu

DEFAULT_SCALES = [0.5, 0.75]
_LANE = 128


def _round_up(x: int, m: int) -> int:
    return ((x + m - 1) // m) * m


# ----------------------------------------------------------------------------
# Glue: bilinear resize matrices (PyTorch align_corners=False semantics).
# ----------------------------------------------------------------------------
def _bilinear_matrix(out_size: int, in_size: int) -> jnp.ndarray:
    """1-D bilinear interpolation matrix of shape (out_size, in_size)."""
    dst = jnp.arange(out_size, dtype=jnp.float32)
    scale = in_size / out_size
    # PyTorch: src = max(0, (dst + 0.5) * scale - 0.5)
    src = jnp.maximum((dst + 0.5) * scale - 0.5, 0.0)
    i0 = jnp.clip(jnp.floor(src).astype(jnp.int32), 0, in_size - 1)
    i1 = jnp.clip(i0 + 1, 0, in_size - 1)
    lam = src - i0.astype(jnp.float32)
    return ((1.0 - lam)[:, None] * jax.nn.one_hot(i0, in_size, dtype=jnp.float32)
            + lam[:, None] * jax.nn.one_hot(i1, in_size, dtype=jnp.float32))


def _resize_matrix_rhs(h_out: int, w_out: int, h_in: int, w_in: int) -> jnp.ndarray:
    """Dense matrix M (h_in*w_in, h_out*w_out): x_flat @ M == bilinear resize."""
    rh = _bilinear_matrix(h_out, h_in)                     # (h_out, h_in)
    rw = _bilinear_matrix(w_out, w_in)                     # (w_out, w_in)
    m = jnp.einsum("yh,xw->hwyx", rh, rw)                  # kron(rh, rw).T layout
    return m.reshape(h_in * w_in, h_out * w_out)


# ----------------------------------------------------------------------------
# Pallas kernel + wrapper.
# ----------------------------------------------------------------------------
def msc_forward(x_nchw, params, scales=DEFAULT_SCALES, num_chunks=1):
    N, Cin, H, W = x_nchw.shape
    Ch = params["w1"].shape[1]
    K = params["w2"].shape[1]
    HW = H * W
    n_scale = len(scales)
    assert N % num_chunks == 0, "num_chunks must divide the batch"
    NB = N // num_chunks                  # images folded into the lane axis per step
    P = NB * HW                           # full-res pixel columns per grid step

    # ---- layout / dtype glue (cheap XLA reshapes & casts) --------------------
    # pixels-on-lanes with batch folded into lanes:
    # (N, Cin, H, W) -> (num_chunks, Cin, NB*HW)
    x_flat = (x_nchw.reshape(num_chunks, NB, Cin, HW)
              .transpose(0, 2, 1, 3)
              .reshape(num_chunks, Cin, P)
              .astype(jnp.bfloat16))

    w1t = params["w1"].T.astype(jnp.bfloat16)              # (Ch, Cin)
    w2t = params["w2"].T.astype(jnp.bfloat16)              # (K,  Ch)
    b1 = params["b1"].reshape(Ch, 1).astype(jnp.float32)   # (Ch, 1)
    b2 = params["b2"].reshape(K, 1).astype(jnp.float32)    # (K,  1)

    # ---- dense (kron) resize matrices, lane-padded + block-diag over NB ------
    # Per-image segments are zero-padded to a multiple of 128 lanes; the zero
    # columns of Rd / zero rows of Ru make the padding inert, so nothing needs
    # zero-initialisation in the kernel.  With NB=2 the padded block widths are
    # multiples of 256 (friendly to the 2x256x256 MXU on v6e/v7x).
    eye_nb = jnp.eye(NB, dtype=jnp.float32)
    r_ops = []
    for s in scales:
        hs, ws = int(math.floor(H * s)), int(math.floor(W * s))
        seg = hs * ws
        seg_pad = _round_up(seg, _LANE)
        rd = _resize_matrix_rhs(hs, ws, H, W)              # (HW, seg)   downsample
        ru = _resize_matrix_rhs(H, W, hs, ws)              # (seg, HW)   upsample
        rd = jnp.pad(rd, ((0, 0), (0, seg_pad - seg)))     # zero pad cols
        ru = jnp.pad(ru, ((0, seg_pad - seg), (0, 0)))     # zero pad rows
        r_ops.append(jnp.kron(eye_nb, rd).astype(jnp.bfloat16))   # (P, NB*seg_pad)
        r_ops.append(jnp.kron(eye_nb, ru).astype(jnp.bfloat16))   # (NB*seg_pad, P)

    def msc_kernel(x_ref, w1t_ref, b1_ref, w2t_ref, b2_ref, *rest):
        r_refs = rest[:2 * n_scale]
        out_ref = rest[2 * n_scale]

        x = x_ref[0]                                       # (Cin, P) bf16

        def base(feat):                                    # (Cin, cols) bf16 -> (K, cols) f32
            h = jnp.dot(w1t_ref[...], feat, preferred_element_type=jnp.float32)
            h = jnp.maximum(h + b1_ref[...], 0.0).astype(jnp.bfloat16)
            return jnp.dot(w2t_ref[...], h, preferred_element_type=jnp.float32) + b2_ref[...]

        out = base(x)                                      # (K, P) f32, full-res branch
        for i in range(n_scale):
            rd = r_refs[2 * i][...]                        # (P, NB*seg_pad) bf16
            ru = r_refs[2 * i + 1][...]                    # (NB*seg_pad, P) bf16
            # downsample all NB images at once (one lane-dense matmul)
            xs = jnp.dot(x, rd, preferred_element_type=jnp.float32).astype(jnp.bfloat16)
            ls = base(xs)                                  # (K, NB*seg_pad) f32
            # upsample + max-fuse (one lane-dense matmul, P-wide f32 output)
            up = jnp.dot(ls.astype(jnp.bfloat16), ru, preferred_element_type=jnp.float32)
            out = jnp.maximum(out, up)                     # (K, P) f32

        out_ref[0] = out                                   # lane-dense store

    def _const_spec(arr):
        nd = arr.ndim
        return pl.BlockSpec(arr.shape, lambda c, _nd=nd: (0,) * _nd)

    in_specs = ([pl.BlockSpec((1, Cin, P), lambda c: (c, 0, 0))]
                + [_const_spec(a) for a in (w1t, b1, w2t, b2)]
                + [_const_spec(r) for r in r_ops])

    out_flat = pl.pallas_call(
        msc_kernel,
        out_shape=jax.ShapeDtypeStruct((num_chunks, K, P), jnp.float32),
        grid_spec=pltpu.PrefetchScalarGridSpec(
            num_scalar_prefetch=0,
            grid=(num_chunks,),
            in_specs=in_specs,
            out_specs=pl.BlockSpec((1, K, P), lambda c: (c, 0, 0)),
        ),
        compiler_params=pltpu.CompilerParams(
            # With num_chunks >= 2 this shards chunks across v7x's two
            # TensorCores; on v5e/v6e num_chunks=1 (one big step) is best.
            dimension_semantics=("parallel",),
        ),
    )(x_flat, w1t, b1, w2t, b2, *r_ops)

    # (num_chunks, K, NB*HW) -> (N, K, H, W): small XLA reshape/transpose.
    return (out_flat.reshape(num_chunks, K, NB, H, W)
            .transpose(0, 2, 1, 3, 4)
            .reshape(N, K, H, W))


# ----------------------------------------------------------------------------
# Pure-JAX reference mirroring the kernel's math (same bf16 operand casts,
# f32 accumulation), for a correctness check.
# ----------------------------------------------------------------------------
def msc_reference(x_nchw, params, scales=DEFAULT_SCALES):
    N, Cin, H, W = x_nchw.shape
    Ch = params["w1"].shape[1]
    K = params["w2"].shape[1]
    HW = H * W

    w1t = params["w1"].T.astype(jnp.bfloat16)
    w2t = params["w2"].T.astype(jnp.bfloat16)
    b1 = params["b1"].reshape(1, Ch, 1).astype(jnp.float32)
    b2 = params["b2"].reshape(1, K, 1).astype(jnp.float32)
    x = x_nchw.reshape(N, Cin, HW).astype(jnp.bfloat16)

    def base(feat):                                        # (N, Cin, cols) bf16 -> (N, K, cols) f32
        h = jnp.einsum("oc,ncp->nop", w1t, feat, preferred_element_type=jnp.float32)
        h = jnp.maximum(h + b1, 0.0).astype(jnp.bfloat16)
        return jnp.einsum("ko,nop->nkp", w2t, h, preferred_element_type=jnp.float32) + b2

    out = base(x)                                          # (N, K, HW) f32
    for s in scales:
        hs, ws = int(math.floor(H * s)), int(math.floor(W * s))
        rd = _resize_matrix_rhs(hs, ws, H, W).astype(jnp.bfloat16)   # (HW, hs*ws)
        ru = _resize_matrix_rhs(H, W, hs, ws).astype(jnp.bfloat16)   # (hs*ws, HW)
        xs = jnp.einsum("ncp,pq->ncq", x, rd,
                        preferred_element_type=jnp.float32).astype(jnp.bfloat16)
        ls = base(xs)
        up = jnp.einsum("nkq,qp->nkp", ls.astype(jnp.bfloat16), ru,
                        preferred_element_type=jnp.float32)
        out = jnp.maximum(out, up)
    return out.reshape(N, K, H, W)


if __name__ == "__main__":
    key = jax.random.PRNGKey(0)
    kx, k1, k2, k3, k4 = jax.random.split(key, 5)

    N, Cin, H, W = 2, 4, 16, 16      # input: NCHW, like the PyTorch module
    Ch, K = 8, 5                     # hidden width / number of classes

    x = jax.random.normal(kx, (N, Cin, H, W), dtype=jnp.float32)
    params = {
        "w1": 0.5 * jax.random.normal(k1, (Cin, Ch), dtype=jnp.float32),
        "b1": 0.1 * jax.random.normal(k2, (1, Ch), dtype=jnp.float32),
        "w2": 0.5 * jax.random.normal(k3, (Ch, K), dtype=jnp.float32),
        "b2": 0.1 * jax.random.normal(k4, (1, K), dtype=jnp.float32),
    }

    out = jax.block_until_ready(msc_forward(x, params, num_chunks=1))
    assert out.shape == (N, K, H, W), out.shape

    ref = jax.block_until_ready(msc_reference(x, params))
    max_err = jnp.max(jnp.abs(out - ref))
    assert jnp.allclose(out, ref, atol=1e-2, rtol=1e-2), (
        f"kernel != reference (max abs err = {max_err})")

    print("KERNEL_OK")
</pallas_src>

<mosaic_0001>
module attributes {stable_mosaic.version = 11 : i64} {
  func.func @msc_kernel(%arg0: i32, %arg1: memref<1x4x512xbf16, #tpu.memory_space<vmem>>, %arg2: memref<8x4xbf16, #tpu.memory_space<vmem>>, %arg3: memref<8x1xf32, #tpu.memory_space<vmem>>, %arg4: memref<5x8xbf16, #tpu.memory_space<vmem>>, %arg5: memref<5x1xf32, #tpu.memory_space<vmem>>, %arg6: memref<512x256xbf16, #tpu.memory_space<vmem>>, %arg7: memref<256x512xbf16, #tpu.memory_space<vmem>>, %arg8: memref<512x512xbf16, #tpu.memory_space<vmem>>, %arg9: memref<512x512xbf16, #tpu.memory_space<vmem>>, %arg10: memref<1x5x512xf32, #tpu.memory_space<vmem>>) attributes {dimension_semantics = [#tpu.dimension_semantics<parallel>], iteration_bounds = array<i64: 1>, scalar_prefetch = 0 : i64, scratch_operands = 0 : i64, tpu.core_type = #tpu.core_type<tc>, window_params = [{transform_indices = @transform_0, window_bounds = array<i64: 1, 4, 512>}, {pipeline_mode = #tpu.pipeline_mode<synchronous>, transform_indices = @transform_1, window_bounds = array<i64: 8, 4>}, {pipeline_mode = #tpu.pipeline_mode<synchronous>, transform_indices = @transform_2, window_bounds = array<i64: 8, 1>}, {pipeline_mode = #tpu.pipeline_mode<synchronous>, transform_indices = @transform_3, window_bounds = array<i64: 5, 8>}, {pipeline_mode = #tpu.pipeline_mode<synchronous>, transform_indices = @transform_4, window_bounds = array<i64: 5, 1>}, {pipeline_mode = #tpu.pipeline_mode<synchronous>, transform_indices = @transform_5, window_bounds = array<i64: 512, 256>}, {pipeline_mode = #tpu.pipeline_mode<synchronous>, transform_indices = @transform_6, window_bounds = array<i64: 256, 512>}, {pipeline_mode = #tpu.pipeline_mode<synchronous>, transform_indices = @transform_7, window_bounds = array<i64: 512, 512>}, {pipeline_mode = #tpu.pipeline_mode<synchronous>, transform_indices = @transform_8, window_bounds = array<i64: 512, 512>}, {transform_indices = @transform_9, window_bounds = array<i64: 1, 5, 512>}]} {
    %c0 = arith.constant 0 : index
    %c0_0 = arith.constant 0 : index
    %c0_1 = arith.constant 0 : index
    %0 = vector.load %arg1[%c0, %c0_0, %c0_1] : memref<1x4x512xbf16, #tpu.memory_space<vmem>>, vector<1x4x512xbf16>
    %1 = vector.shape_cast %0 : vector<1x4x512xbf16> to vector<4x512xbf16>
    %c0_2 = arith.constant 0 : index
    %c0_3 = arith.constant 0 : index
    %2 = vector.load %arg2[%c0_2, %c0_3] : memref<8x4xbf16, #tpu.memory_space<vmem>>, vector<8x4xbf16>
    %cst = arith.constant dense<0.000000e+00> : vector<8x512xf32>
    %3 = tpu.matmul %2, %1, %cst {dimension_numbers = #tpu.dot_dimension_numbers<[1], [0], [0], [1], [0, 0, 1, 1], [], []>} : vector<8x4xbf16>, vector<4x512xbf16>, vector<8x512xf32> -> vector<8x512xf32>
    %c0_4 = arith.constant 0 : index
    %c0_5 = arith.constant 0 : index
    %4 = vector.load %arg3[%c0_4, %c0_5] : memref<8x1xf32, #tpu.memory_space<vmem>>, vector<8x1xf32>
    %5 = vector.broadcast %4 : vector<8x1xf32> to vector<8x512xf32>
    %6 = arith.addf %3, %5 : vector<8x512xf32>
    %cst_6 = arith.constant 0.000000e+00 : f32
    %7 = vector.broadcast %cst_6 : f32 to vector<8x512xf32>
    %8 = arith.maximumf %6, %7 : vector<8x512xf32>
    %9 = arith.truncf %8 : vector<8x512xf32> to vector<8x512xbf16>
    %c0_7 = arith.constant 0 : index
    %c0_8 = arith.constant 0 : index
    %10 = vector.load %arg4[%c0_7, %c0_8] : memref<5x8xbf16, #tpu.memory_space<vmem>>, vector<5x8xbf16>
    %cst_9 = arith.constant dense<0.000000e+00> : vector<5x512xf32>
    %11 = tpu.matmul %10, %9, %cst_9 {dimension_numbers = #tpu.dot_dimension_numbers<[1], [0], [0], [1], [0, 0, 1, 1], [], []>} : vector<5x8xbf16>, vector<8x512xbf16>, vector<5x512xf32> -> vector<5x512xf32>
    %c0_10 = arith.constant 0 : index
    %c0_11 = arith.constant 0 : index
    %12 = vector.load %arg5[%c0_10, %c0_11] : memref<5x1xf32, #tpu.memory_space<vmem>>, vector<5x1xf32>
    %13 = vector.broadcast %12 : vector<5x1xf32> to vector<5x512xf32>
    %14 = arith.addf %11, %13 : vector<5x512xf32>
    %c0_12 = arith.constant 0 : index
    %c0_13 = arith.constant 0 : index
    %15 = vector.load %arg6[%c0_12, %c0_13] : memref<512x256xbf16, #tpu.memory_space<vmem>>, vector<512x256xbf16>
    %c0_14 = arith.constant 0 : index
    %c0_15 = arith.constant 0 : index
    %16 = vector.load %arg7[%c0_14, %c0_15] : memref<256x512xbf16, #tpu.memory_space<vmem>>, vector<256x512xbf16>
    %cst_16 = arith.constant dense<0.000000e+00> : vector<4x256xf32>
    %17 = tpu.matmul %1, %15, %cst_16 {dimension_numbers = #tpu.dot_dimension_numbers<[1], [0], [0], [1], [0, 0, 1, 1], [], []>} : vector<4x512xbf16>, vector<512x256xbf16>, vector<4x256xf32> -> vector<4x256xf32>
    %18 = arith.truncf %17 : vector<4x256xf32> to vector<4x256xbf16>
    %c0_17 = arith.constant 0 : index
    %c0_18 = arith.constant 0 : index
    %19 = vector.load %arg2[%c0_17, %c0_18] : memref<8x4xbf16, #tpu.memory_space<vmem>>, vector<8x4xbf16>
    %cst_19 = arith.constant dense<0.000000e+00> : vector<8x256xf32>
    %20 = tpu.matmul %19, %18, %cst_19 {dimension_numbers = #tpu.dot_dimension_numbers<[1], [0], [0], [1], [0, 0, 1, 1], [], []>} : vector<8x4xbf16>, vector<4x256xbf16>, vector<8x256xf32> -> vector<8x256xf32>
    %c0_20 = arith.constant 0 : index
    %c0_21 = arith.constant 0 : index
    %21 = vector.load %arg3[%c0_20, %c0_21] : memref<8x1xf32, #tpu.memory_space<vmem>>, vector<8x1xf32>
    %22 = vector.broadcast %21 : vector<8x1xf32> to vector<8x256xf32>
    %23 = arith.addf %20, %22 : vector<8x256xf32>
    %cst_22 = arith.constant 0.000000e+00 : f32
    %24 = vector.broadcast %cst_22 : f32 to vector<8x256xf32>
    %25 = arith.maximumf %23, %24 : vector<8x256xf32>
    %26 = arith.truncf %25 : vector<8x256xf32> to vector<8x256xbf16>
    %c0_23 = arith.constant 0 : index
    %c0_24 = arith.constant 0 : index
    %27 = vector.load %arg4[%c0_23, %c0_24] : memref<5x8xbf16, #tpu.memory_space<vmem>>, vector<5x8xbf16>
    %cst_25 = arith.constant dense<0.000000e+00> : vector<5x256xf32>
    %28 = tpu.matmul %27, %26, %cst_25 {dimension_numbers = #tpu.dot_dimension_numbers<[1], [0], [0], [1], [0, 0, 1, 1], [], []>} : vector<5x8xbf16>, vector<8x256xbf16>, vector<5x256xf32> -> vector<5x256xf32>
    %c0_26 = arith.constant 0 : index
    %c0_27 = arith.constant 0 : index
    %29 = vector.load %arg5[%c0_26, %c0_27] : memref<5x1xf32, #tpu.memory_space<vmem>>, vector<5x1xf32>
    %30 = vector.broadcast %29 : vector<5x1xf32> to vector<5x256xf32>
    %31 = arith.addf %28, %30 : vector<5x256xf32>
    %32 = arith.truncf %31 : vector<5x256xf32> to vector<5x256xbf16>
    %cst_28 = arith.constant dense<0.000000e+00> : vector<5x512xf32>
    %33 = tpu.matmul %32, %16, %cst_28 {dimension_numbers = #tpu.dot_dimension_numbers<[1], [0], [0], [1], [0, 0, 1, 1], [], []>} : vector<5x256xbf16>, vector<256x512xbf16>, vector<5x512xf32> -> vector<5x512xf32>
    %34 = arith.maximumf %14, %33 : vector<5x512xf32>
    %c0_29 = arith.constant 0 : index
    %c0_30 = arith.constant 0 : index
    %35 = vector.load %arg8[%c0_29, %c0_30] : memref<512x512xbf16, #tpu.memory_space<vmem>>, vector<512x512xbf16>
    %c0_31 = arith.constant 0 : index
    %c0_32 = arith.constant 0 : index
    %36 = vector.load %arg9[%c0_31, %c0_32] : memref<512x512xbf16, #tpu.memory_space<vmem>>, vector<512x512xbf16>
    %cst_33 = arith.constant dense<0.000000e+00> : vector<4x512xf32>
    %37 = tpu.matmul %1, %35, %cst_33 {dimension_numbers = #tpu.dot_dimension_numbers<[1], [0], [0], [1], [0, 0, 1, 1], [], []>} : vector<4x512xbf16>, vector<512x512xbf16>, vector<4x512xf32> -> vector<4x512xf32>
    %38 = arith.truncf %37 : vector<4x512xf32> to vector<4x512xbf16>
    %c0_34 = arith.constant 0 : index
    %c0_35 = arith.constant 0 : index
    %39 = vector.load %arg2[%c0_34, %c0_35] : memref<8x4xbf16, #tpu.memory_space<vmem>>, vector<8x4xbf16>
    %cst_36 = arith.constant dense<0.000000e+00> : vector<8x512xf32>
    %40 = tpu.matmul %39, %38, %cst_36 {dimension_numbers = #tpu.dot_dimension_numbers<[1], [0], [0], [1], [0, 0, 1, 1], [], []>} : vector<8x4xbf16>, vector<4x512xbf16>, vector<8x512xf32> -> vector<8x512xf32>
    %c0_37 = arith.constant 0 : index
    %c0_38 = arith.constant 0 : index
    %41 = vector.load %arg3[%c0_37, %c0_38] : memref<8x1xf32, #tpu.memory_space<vmem>>, vector<8x1xf32>
    %42 = vector.broadcast %41 : vector<8x1xf32> to vector<8x512xf32>
    %43 = arith.addf %40, %42 : vector<8x512xf32>
    %cst_39 = arith.constant 0.000000e+00 : f32
    %44 = vector.broadcast %cst_39 : f32 to vector<8x512xf32>
    %45 = arith.maximumf %43, %44 : vector<8x512xf32>
    %46 = arith.truncf %45 : vector<8x512xf32> to vector<8x512xbf16>
    %c0_40 = arith.constant 0 : index
    %c0_41 = arith.constant 0 : index
    %47 = vector.load %arg4[%c0_40, %c0_41] : memref<5x8xbf16, #tpu.memory_space<vmem>>, vector<5x8xbf16>
    %cst_42 = arith.constant dense<0.000000e+00> : vector<5x512xf32>
    %48 = tpu.matmul %47, %46, %cst_42 {dimension_numbers = #tpu.dot_dimension_numbers<[1], [0], [0], [1], [0, 0, 1, 1], [], []>} : vector<5x8xbf16>, vector<8x512xbf16>, vector<5x512xf32> -> vector<5x512xf32>
    %c0_43 = arith.constant 0 : index
    %c0_44 = arith.constant 0 : index
    %49 = vector.load %arg5[%c0_43, %c0_44] : memref<5x1xf32, #tpu.memory_space<vmem>>, vector<5x1xf32>
    %50 = vector.broadcast %49 : vector<5x1xf32> to vector<5x512xf32>
    %51 = arith.addf %48, %50 : vector<5x512xf32>
    %52 = arith.truncf %51 : vector<5x512xf32> to vector<5x512xbf16>
    %cst_45 = arith.constant dense<0.000000e+00> : vector<5x512xf32>
    %53 = tpu.matmul %52, %36, %cst_45 {dimension_numbers = #tpu.dot_dimension_numbers<[1], [0], [0], [1], [0, 0, 1, 1], [], []>} : vector<5x512xbf16>, vector<512x512xbf16>, vector<5x512xf32> -> vector<5x512xf32>
    %54 = arith.maximumf %34, %53 : vector<5x512xf32>
    %c0_46 = arith.constant 0 : index
    %c0_47 = arith.constant 0 : index
    %c0_48 = arith.constant 0 : index
    %55 = vector.load %arg10[%c0_46, %c0_47, %c0_48] : memref<1x5x512xf32, #tpu.memory_space<vmem>>, vector<1x5x512xf32>
    %56 = vector.shape_cast %55 : vector<1x5x512xf32> to vector<5x512xf32>
    %57 = vector.shape_cast %54 : vector<5x512xf32> to vector<1x5x512xf32>
    tpu.vector_store %arg10[%c0_46, %c0_47, %c0_48], %57 {strides = array<i32>} : memref<1x5x512xf32, #tpu.memory_space<vmem>>, vector<1x5x512xf32>,
    return
  }
  func.func @transform_0(%arg0: i32) -> (i32, i32, i32) {
    %c0_i32 = arith.constant 0 : i32
    %c0_i32_0 = arith.constant 0 : i32
    %c0_i32_1 = arith.constant 0 : i32
    return %arg0, %c0_i32, %c0_i32_0 : i32, i32, i32
  }
  func.func @transform_1(%arg0: i32) -> (i32, i32) {
    %c0_i32 = arith.constant 0 : i32
    %c0_i32_0 = arith.constant 0 : i32
    %c0_i32_1 = arith.constant 0 : i32
    return %c0_i32, %c0_i32_0 : i32, i32
  }
  func.func @transform_2(%arg0: i32) -> (i32, i32) {
    %c0_i32 = arith.constant 0 : i32
    %c0_i32_0 = arith.constant 0 : i32
    %c0_i32_1 = arith.constant 0 : i32
    return %c0_i32, %c0_i32_0 : i32, i32
  }
  func.func @transform_3(%arg0: i32) -> (i32, i32) {
    %c0_i32 = arith.constant 0 : i32
    %c0_i32_0 = arith.constant 0 : i32
    %c0_i32_1 = arith.constant 0 : i32
    return %c0_i32, %c0_i32_0 : i32, i32
  }
  func.func @transform_4(%arg0: i32) -> (i32, i32) {
    %c0_i32 = arith.constant 0 : i32
    %c0_i32_0 = arith.constant 0 : i32
    %c0_i32_1 = arith.constant 0 : i32
    return %c0_i32, %c0_i32_0 : i32, i32
  }
  func.func @transform_5(%arg0: i32) -> (i32, i32) {
    %c0_i32 = arith.constant 0 : i32
    %c0_i32_0 = arith.constant 0 : i32
    %c0_i32_1 = arith.constant 0 : i32
    return %c0_i32, %c0_i32_0 : i32, i32
  }
  func.func @transform_6(%arg0: i32) -> (i32, i32) {
    %c0_i32 = arith.constant 0 : i32
    %c0_i32_0 = arith.constant 0 : i32
    %c0_i32_1 = arith.constant 0 : i32
    return %c0_i32, %c0_i32_0 : i32, i32
  }
  func.func @transform_7(%arg0: i32) -> (i32, i32) {
    %c0_i32 = arith.constant 0 : i32
    %c0_i32_0 = arith.constant 0 : i32
    %c0_i32_1 = arith.constant 0 : i32
    return %c0_i32, %c0_i32_0 : i32, i32
  }
  func.func @transform_8(%arg0: i32) -> (i32, i32) {
    %c0_i32 = arith.constant 0 : i32
    %c0_i32_0 = arith.constant 0 : i32
    %c0_i32_1 = arith.constant 0 : i32
    return %c0_i32, %c0_i32_0 : i32, i32
  }
  func.func @transform_9(%arg0: i32) -> (i32, i32, i32) {
    %c0_i32 = arith.constant 0 : i32
    %c0_i32_0 = arith.constant 0 : i32
    %c0_i32_1 = arith.constant 0 : i32
    return %arg0, %c0_i32, %c0_i32_0 : i32, i32, i32
  }
}

</mosaic_0001>

<llo_original>
// kernel: tpu_custom_call.1
$region0: #{tpu_custom_call.1}
  #allocation0 [shape = 'u32[]', space=smem, size = 0x4, offset = 0x4, fixed_abs, tag = 'smem constant byte address 0x4 - core index']
  #allocation1 [shape = 'u32[144,128]{1,0:T(1,128)}', space=vmem, size = 0x12000, scoped, tag = 'internal scratch']
  %s0 = inlined_call_operand.vmem [shape: bf16[1,4,512], index: 0, kind: input, shape index: {}]
  %s1 = inlined_call_operand.vmem [shape: bf16[8,4], index: 1, kind: input, shape index: {}]
  %s2 = inlined_call_operand.vmem [shape: f32[8,1], index: 2, kind: input, shape index: {}]
  %s3 = inlined_call_operand.vmem [shape: bf16[5,8], index: 3, kind: input, shape index: {}]
  %s4 = inlined_call_operand.vmem [shape: f32[5,1], index: 4, kind: input, shape index: {}]
  %s5 = inlined_call_operand.hbm [shape: bf16[512,256], index: 5, kind: input, shape index: {}]
  %s6 = inlined_call_operand.hbm [shape: bf16[256,512], index: 6, kind: input, shape index: {}]
  %s7 = inlined_call_operand.hbm [shape: bf16[512,512], index: 7, kind: input, shape index: {}]
  %s8 = inlined_call_operand.hbm [shape: bf16[512,512], index: 8, kind: input, shape index: {}]
  %s9 = inlined_call_operand.vmem [shape: f32[1,5,512], index: 9, kind: output, shape index: {}]
  %s10 = sld [smem:[#allocation0]]
  $region62: #{tpu_custom_call.1} parent=0
    _
  %s12 = ssub.s32 1, %s10
  %s13 = scalar_select 0, %s12, %s10
  $region1: #{tpu_custom_call.1} parent=0
    #allocation2 [shape = 'u8[262144]{0}', space=vmem, size = 0x40000, scoped, tag = 'input window, operand 5, single buffered']
    #allocation3 [shape = 's32[1]{0}', space=sflag, size = 0x4, scoped, tag = 'scoped memory for tpu_custom_call.1']
    #allocation4 [shape = 'u8[262144]{0}', space=vmem, size = 0x40000, scoped, tag = 'input window, operand 6, single buffered']
    #allocation5 [shape = 's32[1]{0}', space=sflag, size = 0x4, scoped, tag = 'scoped memory for tpu_custom_call.1']
    #allocation6 [shape = 'u8[524288]{0}', space=vmem, size = 0x80000, scoped, tag = 'input window, operand 7, single buffered']
    #allocation7 [shape = 'u8[524288]{0}', space=vmem, size = 0x80000, scoped, tag = 'input window, operand 8, single buffered']
    #allocation8 [shape = 's32[1]{0}', space=sflag, size = 0x4, scoped, tag = 'scoped memory for tpu_custom_call.1']
    %14 = vsyncpa [#allocation3], 0
    %15 = vsyncpa [#allocation5], 0
    %16 = vsyncpa [#allocation8], 0
    // Predicated region
    $region2: #{tpu_custom_call.1} parent=1 // pred_check
      _
    $region3: #{tpu_custom_call.1} parent=1 // pred_check_branch
      %18 = sbr.rel (0) target = $region5
    $region4: #{tpu_custom_call.1} parent=1 // pred_region
      _
    $region5: #{tpu_custom_call.1} parent=1 // pred_fallthru
      _
    // Predicated region
    $region6: #{tpu_custom_call.1} parent=1 // pred_check
      _
    $region7: #{tpu_custom_call.1} parent=1 // pred_check_branch
      %20 = sbr.rel (0) target = $region9
    $region8: #{tpu_custom_call.1} parent=1 // pred_region
      _
    $region9: #{tpu_custom_call.1} parent=1 // pred_fallthru
      _
    // Predicated region
    $region10: #{tpu_custom_call.1} parent=1 // pred_check
      _
    $region11: #{tpu_custom_call.1} parent=1 // pred_check_branch
      %22 = sbr.rel (0) target = $region13
    $region12: #{tpu_custom_call.1} parent=1 // pred_region
      _
    $region13: #{tpu_custom_call.1} parent=1 // pred_fallthru
      _
    // Predicated region
    $region14: #{tpu_custom_call.1} parent=1 // pred_check
      _
    $region15: #{tpu_custom_call.1} parent=1 // pred_check_branch
      %24 = sbr.rel (0) target = $region17
    $region16: #{tpu_custom_call.1} parent=1 // pred_region
      _
    $region17: #{tpu_custom_call.1} parent=1 // pred_fallthru
      _
    // Predicated region
    $region18: #{tpu_custom_call.1} parent=1 // pred_check
      _
    $region19: #{tpu_custom_call.1} parent=1 // pred_check_branch
      %26 = sbr.rel (0) target = $region21
    $region20: #{tpu_custom_call.1} parent=1 // pred_region
      _
    $region21: #{tpu_custom_call.1} parent=1 // pred_fallthru
      _
    // Predicated region
    $region22: #{tpu_custom_call.1} parent=1 // pred_check
      _
    $region23: #{tpu_custom_call.1} parent=1 // pred_check_branch
      %28 = sbr.rel (0) target = $region25
    $region24: #{tpu_custom_call.1} parent=1 // pred_region
      %s30 = ssub.s32 8192, 8192
      %31 = vsyncadd [#allocation3], %s30
      %s32 = sshll.u32 [#allocation2], 4
      %s33 = int_to_ptr.vmem [resolvable:$true] %s32
      %38 = dma.hbm_to_vmem [thread:$0]  %s5, 8192, %s33, [#allocation3], 128, 128, 8
    $region25: #{tpu_custom_call.1} parent=1 // pred_fallthru
      _
    // Predicated region
    $region26: #{tpu_custom_call.1} parent=1 // pred_check
      _
    $region27: #{tpu_custom_call.1} parent=1 // pred_check_branch
      %40 = sbr.rel (0) target = $region29
    $region28: #{tpu_custom_call.1} parent=1 // pred_region
      %s42 = ssub.s32 8192, 8192
      %43 = vsyncadd [#allocation5], %s42
      %s44 = sshll.u32 [#allocation4], 4
      %s45 = int_to_ptr.vmem [resolvable:$true] %s44
      %50 = dma.hbm_to_vmem [thread:$0]  %s6, 8192, %s45, [#allocation5], 256, 256, 16
    $region29: #{tpu_custom_call.1} parent=1 // pred_fallthru
      _
    // Predicated region
    $region30: #{tpu_custom_call.1} parent=1 // pred_check
      _
    $region31: #{tpu_custom_call.1} parent=1 // pred_check_branch
      %52 = sbr.rel (0) target = $region33
    $region32: #{tpu_custom_call.1} parent=1 // pred_region
      %s54 = ssub.s32 16384, 16384
      %55 = vsyncadd [#allocation5], %s54
      %s56 = sshll.u32 [#allocation6], 4
      %s57 = int_to_ptr.vmem [resolvable:$true] %s56
      %62 = dma.hbm_to_vmem [thread:$0]  %s7, 16384, %s57, [#allocation5], 256, 256, 16
    $region33: #{tpu_custom_call.1} parent=1 // pred_fallthru
      _
    // Predicated region
    $region34: #{tpu_custom_call.1} parent=1 // pred_check
      _
    $region35: #{tpu_custom_call.1} parent=1 // pred_check_branch
      %64 = sbr.rel (0) target = $region37
    $region36: #{tpu_custom_call.1} parent=1 // pred_region
      %s66 = ssub.s32 16384, 16384
      %67 = vsyncadd [#allocation8], %s66
      %s68 = sshll.u32 [#allocation7], 4
      %s69 = int_to_ptr.vmem [resolvable:$true] %s68
      %74 = dma.hbm_to_vmem [thread:$0]  %s8, 16384, %s69, [#allocation8], 256, 256, 16
    $region37: #{tpu_custom_call.1} parent=1 // pred_fallthru
      _
    // Predicated region
    $region38: #{tpu_custom_call.1} parent=1 // pred_check
      _
    $region39: #{tpu_custom_call.1} parent=1 // pred_check_branch
      %76 = sbr.rel (0) target = $region41
    $region40: #{tpu_custom_call.1} parent=1 // pred_region
      %77 = dma.done [#allocation3], 8192
    $region41: #{tpu_custom_call.1} parent=1 // pred_fallthru
      _
    // Predicated region
    $region42: #{tpu_custom_call.1} parent=1 // pred_check
      _
    $region43: #{tpu_custom_call.1} parent=1 // pred_check_branch
      %79 = sbr.rel (0) target = $region45
    $region44: #{tpu_custom_call.1} parent=1 // pred_region
      %80 = dma.done [#allocation5], 8192
    $region45: #{tpu_custom_call.1} parent=1 // pred_fallthru
      _
    // Predicated region
    $region46: #{tpu_custom_call.1} parent=1 // pred_check
      _
    $region47: #{tpu_custom_call.1} parent=1 // pred_check_branch
      %82 = sbr.rel (0) target = $region49
    $region48: #{tpu_custom_call.1} parent=1 // pred_region
      %83 = dma.done [#allocation5], 16384
    $region49: #{tpu_custom_call.1} parent=1 // pred_fallthru
      _
    // Predicated region
    $region50: #{tpu_custom_call.1} parent=1 // pred_check
      _
    $region51: #{tpu_custom_call.1} parent=1 // pred_check_branch
      %85 = sbr.rel (0) target = $region53
    $region52: #{tpu_custom_call.1} parent=1 // pred_region
      %86 = dma.done [#allocation8], 16384
    $region53: #{tpu_custom_call.1} parent=1 // pred_fallthru
      _
    %v88 = vld [vmem:[%s0] sm:$0xff]
    %v89 = vld [vmem:[%s1] sm:$0xf]
    %v90 = vld [vmem:[%s2] sm:$0xff]
    %92 = vset.pattern.permute.xlu0 0
    %93 = vperm.xlu0 %92, %v90
    %v94 = vpop.permute.xlu0 %93
    %v97 = vcombine.high %v88, %v88
    %v99 = vunpack.c.l.s4 1983009808
    %v100 = vunpack.c.0.s8 %v99
    %v101 = vlaneseq
    %v102 = vshrl.u32 %v101, 7
    %v103 = vsub.s32 %v100, %v102
    %v104 = vrot.slane %v88, %v103
    %v106 = vunpack.c.l.s4 1983009808
    %v107 = vunpack.c.0.s8 %v106
    %v108 = vlaneseq
    %v109 = vshrl.u32 %v108, 7
    %v110 = vsub.s32 %v107, %v109
    %v111 = vrot.slane %v97, %v110
    %v112 = vcombine.high %v104, %v104
    %v113 = vcombine.high %v111, %v111
    %vm114 = vcmask 31744
    %v116 = vsel %vm114, %v89, 0
    %vm118 = vcmask 1041408
    %v120 = vsel %vm118, %v104, 0
    %v123 = vsel %vm118, %v112, 0
    %v126 = vsel %vm118, %v111, 0
    %v129 = vsel %vm118, %v113, 0
    %131 = vmatprep.subr.bf16.mxu0 %v123
    %132 = vmatpush1.bf16.msra.mxu0 %v120
    %133 = vmatprep.subr.bf16.mxu0 0
    %134 = vmatpush1.bf16.msra.mxu0 0
    %135 = vmatprep.subr.bf16.mxu0 0
    %136 = vmatpush1.bf16.msra.mxu0 0
    %137 = vmatprep.subr.bf16.mxu0 0
    %138 = vmatpush1.bf16.msra.mxu0 0
    %139 = vmatprep.subr.bf16.mxu0 0
    %140 = vmatpush1.bf16.msra.mxu0 0
    %141 = vmatprep.subr.bf16.mxu0 0
    %142 = vmatpush1.bf16.msra.mxu0 0
    %143 = vmatprep.subr.bf16.mxu0 0
    %144 = vmatpush1.bf16.msra.mxu0 0
    %145 = vmatprep.subr.bf16.mxu0 0
    %146 = vmatpush1.bf16.msra.mxu0 0
    %147 = vmatprep.subr.bf16.mxu0 0
    %148 = vmatpush1.bf16.msra.mxu0 0
    %149 = vmatprep.subr.bf16.mxu0 0
    %150 = vmatpush1.bf16.msra.mxu0 0
    %151 = vmatprep.subr.bf16.mxu0 0
    %152 = vmatpush1.bf16.msra.mxu0 0
    %153 = vmatprep.subr.bf16.mxu0 0
    %154 = vmatpush1.bf16.msra.mxu0 0
    %155 = vmatprep.subr.bf16.mxu0 0
    %156 = vmatpush1.bf16.msra.mxu0 0
    %157 = vmatprep.subr.bf16.mxu0 0
    %158 = vmatpush1.bf16.msra.mxu0 0
    %159 = vmatprep.subr.bf16.mxu0 0
    %160 = vmatpush1.bf16.msra.mxu0 0
    %161 = vmatprep.subr.bf16.mxu0 0
    %162 = vmatpush1.bf16.msra.mxu0 0
    %163 = vmatprep.mubr.bf16.mxu0 0
    %164 = vmatmul.mubr.bf16.gmra.mrb[0].mxu0 %v116
    %v165 = vpop.f32.mrb[0].mxu0
    %v166 = vadd.f32 %v94, %v165
    %v167 = vpop.f32.mrb[0].mxu0
    %v168 = vadd.f32 %v94, %v167
    %v169 = vpop.f32.mrb[0].mxu0
    %v170 = vpop.f32.mrb[0].mxu0
    %171 = vdwg.mxu0
    %172 = vmatprep.subr.bf16.mxu0 %v129
    %173 = vmatpush1.bf16.msra.mxu0 %v126
    %174 = vmatprep.subr.bf16.mxu0 0
    %175 = vmatpush1.bf16.msra.mxu0 0
    %176 = vmatprep.subr.bf16.mxu0 0
    %177 = vmatpush1.bf16.msra.mxu0 0
    %178 = vmatprep.subr.bf16.mxu0 0
    %179 = vmatpush1.bf16.msra.mxu0 0
    %180 = vmatprep.subr.bf16.mxu0 0
    %181 = vmatpush1.bf16.msra.mxu0 0
    %182 = vmatprep.subr.bf16.mxu0 0
    %183 = vmatpush1.bf16.msra.mxu0 0
    %184 = vmatprep.subr.bf16.mxu0 0
    %185 = vmatpush1.bf16.msra.mxu0 0
    %186 = vmatprep.subr.bf16.mxu0 0
    %187 = vmatpush1.bf16.msra.mxu0 0
    %188 = vmatprep.subr.bf16.mxu0 0
    %189 = vmatpush1.bf16.msra.mxu0 0
    %190 = vmatprep.subr.bf16.mxu0 0
    %191 = vmatpush1.bf16.msra.mxu0 0
    %192 = vmatprep.subr.bf16.mxu0 0
    %193 = vmatpush1.bf16.msra.mxu0 0
    %194 = vmatprep.subr.bf16.mxu0 0
    %195 = vmatpush1.bf16.msra.mxu0 0
    %196 = vmatprep.subr.bf16.mxu0 0
    %197 = vmatpush1.bf16.msra.mxu0 0
    %198 = vmatprep.subr.bf16.mxu0 0
    %199 = vmatpush1.bf16.msra.mxu0 0
    %200 = vmatprep.subr.bf16.mxu0 0
    %201 = vmatpush1.bf16.msra.mxu0 0
    %202 = vmatprep.subr.bf16.mxu0 0
    %203 = vmatpush1.bf16.msra.mxu0 0
    %204 = vmatprep.mubr.bf16.mxu0 0
    %205 = vmatmul.mubr.bf16.gmra.mrb[0].mxu0 %v116
    %v206 = vpop.f32.mrb[0].mxu0
    %v207 = vadd.f32 %v94, %v206
    %v208 = vpop.f32.mrb[0].mxu0
    %v209 = vadd.f32 %v94, %v208
    %v210 = vpop.f32.mrb[0].mxu0
    %v211 = vpop.f32.mrb[0].mxu0
    %212 = vdwg.mxu0
    %v213 = vmax.f32 %v166, 0.0
    %v214 = vmax.f32 %v168, 0.0
    %v215 = vmax.f32 %v207, 0.0
    %v216 = vmax.f32 %v209, 0.0
    %v217 = vpack.c.bf16 %v213, %v213
    %v218 = vpack.c.bf16 %v214, %v214
    %v219 = vpack.c.bf16 %v215, %v215
    %v220 = vpack.c.bf16 %v216, %v216
    %v221 = vld [vmem:[%s3] sm:$0x7]
    %v222 = vld [vmem:[%s4] sm:$0x1f]
    %224 = vset.pattern.permute.xlu0 0
    %225 = vperm.xlu0 %224, %v222
    %v226 = vpop.permute.xlu0 %225
    %vm228 = vcmask 64512
    %v230 = vsel %vm228, %v221, 0
    %vm232 = vcmask 1043456
    %v234 = vsel %vm232, %v217, 0
    %v237 = vsel %vm232, %v218, 0
    %v240 = vsel %vm232, %v219, 0
    %v243 = vsel %vm232, %v220, 0
    %245 = vmatprep.subr.bf16.mxu0 %v237
    %246 = vmatpush1.bf16.msra.mxu0 %v234
    %247 = vmatprep.subr.bf16.mxu0 0
    %248 = vmatpush1.bf16.msra.mxu0 0
    %249 = vmatprep.subr.bf16.mxu0 0
    %250 = vmatpush1.bf16.msra.mxu0 0
    %251 = vmatprep.subr.bf16.mxu0 0
    %252 = vmatpush1.bf16.msra.mxu0 0
    %253 = vmatprep.subr.bf16.mxu0 0
    %254 = vmatpush1.bf16.msra.mxu0 0
    %255 = vmatprep.subr.bf16.mxu0 0
    %256 = vmatpush1.bf16.msra.mxu0 0
    %257 = vmatprep.subr.bf16.mxu0 0
    %258 = vmatpush1.bf16.msra.mxu0 0
    %259 = vmatprep.subr.bf16.mxu0 0
    %260 = vmatpush1.bf16.msra.mxu0 0
    %261 = vmatprep.subr.bf16.mxu0 0
    %262 = vmatpush1.bf16.msra.mxu0 0
    %263 = vmatprep.subr.bf16.mxu0 0
    %264 = vmatpush1.bf16.msra.mxu0 0
    %265 = vmatprep.subr.bf16.mxu0 0
    %266 = vmatpush1.bf16.msra.mxu0 0
    %267 = vmatprep.subr.bf16.mxu0 0
    %268 = vmatpush1.bf16.msra.mxu0 0
    %269 = vmatprep.subr.bf16.mxu0 0
    %270 = vmatpush1.bf16.msra.mxu0 0
    %271 = vmatprep.subr.bf16.mxu0 0
    %272 = vmatpush1.bf16.msra.mxu0 0
    %273 = vmatprep.subr.bf16.mxu0 0
    %274 = vmatpush1.bf16.msra.mxu0 0
    %275 = vmatprep.subr.bf16.mxu0 0
    %276 = vmatpush1.bf16.msra.mxu0 0
    %277 = vmatprep.mubr.bf16.mxu0 0
    %278 = vmatmul.mubr.bf16.gmra.mrb[0].mxu0 %v230
    %v279 = vpop.f32.mrb[0].mxu0
    %v280 = vadd.f32 %v226, %v279
    %v281 = vpop.f32.mrb[0].mxu0
    %v282 = vadd.f32 %v226, %v281
    %v283 = vpop.f32.mrb[0].mxu0
    %v284 = vpop.f32.mrb[0].mxu0
    %285 = vdwg.mxu0
    %286 = vmatprep.subr.bf16.mxu0 %v243
    %287 = vmatpush1.bf16.msra.mxu0 %v240
    %288 = vmatprep.subr.bf16.mxu0 0
    %289 = vmatpush1.bf16.msra.mxu0 0
    %290 = vmatprep.subr.bf16.mxu0 0
    %291 = vmatpush1.bf16.msra.mxu0 0
    %292 = vmatprep.subr.bf16.mxu0 0
    %293 = vmatpush1.bf16.msra.mxu0 0
    %294 = vmatprep.subr.bf16.mxu0 0
    %295 = vmatpush1.bf16.msra.mxu0 0
    %296 = vmatprep.subr.bf16.mxu0 0
    %297 = vmatpush1.bf16.msra.mxu0 0
    %298 = vmatprep.subr.bf16.mxu0 0
    %299 = vmatpush1.bf16.msra.mxu0 0
    %300 = vmatprep.subr.bf16.mxu0 0
    %301 = vmatpush1.bf16.msra.mxu0 0
    %302 = vmatprep.subr.bf16.mxu0 0
    %303 = vmatpush1.bf16.msra.mxu0 0
    %304 = vmatprep.subr.bf16.mxu0 0
    %305 = vmatpush1.bf16.msra.mxu0 0
    %306 = vmatprep.subr.bf16.mxu0 0
    %307 = vmatpush1.bf16.msra.mxu0 0
    %308 = vmatprep.subr.bf16.mxu0 0
    %309 = vmatpush1.bf16.msra.mxu0 0
    %310 = vmatprep.subr.bf16.mxu0 0
    %311 = vmatpush1.bf16.msra.mxu0 0
    %312 = vmatprep.subr.bf16.mxu0 0
    %313 = vmatpush1.bf16.msra.mxu0 0
    %314 = vmatprep.subr.bf16.mxu0 0
    %315 = vmatpush1.bf16.msra.mxu0 0
    %316 = vmatprep.subr.bf16.mxu0 0
    %317 = vmatpush1.bf16.msra.mxu0 0
    %318 = vmatprep.mubr.bf16.mxu0 0
    %319 = vmatmul.mubr.bf16.gmra.mrb[0].mxu0 %v230
    %v320 = vpop.f32.mrb[0].mxu0
    %v321 = vadd.f32 %v226, %v320
    %v322 = vpop.f32.mrb[0].mxu0
    %v323 = vadd.f32 %v226, %v322
    %v324 = vpop.f32.mrb[0].mxu0
    %v325 = vpop.f32.mrb[0].mxu0
    %326 = vdwg.mxu0
    %v327 = vld [vmem:[#allocation2] sm:$0xff]
    %v328 = vld [vmem:[#allocation2 + $0x8] sm:$0xff]
    %v329 = vld [vmem:[#allocation2 + $0x10] sm:$0xff]
    %v330 = vld [vmem:[#allocation2 + $0x18] sm:$0xff]
    %v331 = vld [vmem:[#allocation2 + $0x20] sm:$0xff]
    %v332 = vld [vmem:[#allocation2 + $0x28] sm:$0xff]
    %v333 = vld [vmem:[#allocation2 + $0x30] sm:$0xff]
    %v334 = vld [vmem:[#allocation2 + $0x38] sm:$0xff]
    %v335 = vld [vmem:[#allocation2 + $0x40] sm:$0xff]
    %v336 = vld [vmem:[#allocation2 + $0x48] sm:$0xff]
    %v337 = vld [vmem:[#allocation2 + $0x50] sm:$0xff]
    %v338 = vld [vmem:[#allocation2 + $0x58] sm:$0xff]
    %v339 = vld [vmem:[#allocation2 + $0x60] sm:$0xff]
    %v340 = vld [vmem:[#allocation2 + $0x68] sm:$0xff]
    %v341 = vld [vmem:[#allocation2 + $0x70] sm:$0xff]
    %v342 = vld [vmem:[#allocation2 + $0x78] sm:$0xff]
    %v343 = vld [vmem:[#allocation2 + $0x80] sm:$0xff]
    %v344 = vld [vmem:[#allocation2 + $0x88] sm:$0xff]
    %v345 = vld [vmem:[#allocation2 + $0x90] sm:$0xff]
    %v346 = vld [vmem:[#allocation2 + $0x98] sm:$0xff]
    %v347 = vld [vmem:[#allocation2 + $0xa0] sm:$0xff]
    %v348 = vld [vmem:[#allocation2 + $0xa8] sm:$0xff]
    %v349 = vld [vmem:[#allocation2 + $0xb0] sm:$0xff]
    %v350 = vld [vmem:[#allocation2 + $0xb8] sm:$0xff]
    %v351 = vld [vmem:[#allocation2 + $0xc0] sm:$0xff]
    %v352 = vld [vmem:[#allocation2 + $0xc8] sm:$0xff]
    %v353 = vld [vmem:[#allocation2 + $0xd0] sm:$0xff]
    %v354 = vld [vmem:[#allocation2 + $0xd8] sm:$0xff]
    %v355 = vld [vmem:[#allocation2 + $0xe0] sm:$0xff]
    %v356 = vld [vmem:[#allocation2 + $0xe8] sm:$0xff]
    %v357 = vld [vmem:[#allocation2 + $0xf0] sm:$0xff]
    %v358 = vld [vmem:[#allocation2 + $0xf8] sm:$0xff]
    %v359 = vld [vmem:[#allocation2 + $0x100] sm:$0xff]
    %v360 = vld [vmem:[#allocation2 + $0x108] sm:$0xff]
    %v361 = vld [vmem:[#allocation2 + $0x110] sm:$0xff]
    %v362 = vld [vmem:[#allocation2 + $0x118] sm:$0xff]
    %v363 = vld [vmem:[#allocation2 + $0x120] sm:$0xff]
    %v364 = vld [vmem:[#allocation2 + $0x128] sm:$0xff]
    %v365 = vld [vmem:[#allocation2 + $0x130] sm:$0xff]
    %v366 = vld [vmem:[#allocation2 + $0x138] sm:$0xff]
    %v367 = vld [vmem:[#allocation2 + $0x140] sm:$0xff]
    %v368 = vld [vmem:[#allocation2 + $0x148] sm:$0xff]
    %v369 = vld [vmem:[#allocation2 + $0x150] sm:$0xff]
    %v370 = vld [vmem:[#allocation2 + $0x158] sm:$0xff]
    %v371 = vld [vmem:[#allocation2 + $0x160] sm:$0xff]
    %v372 = vld [vmem:[#allocation2 + $0x168] sm:$0xff]
    %v373 = vld [vmem:[#allocation2 + $0x170] sm:$0xff]
    %v374 = vld [vmem:[#allocation2 + $0x178] sm:$0xff]
    %v375 = vld [vmem:[#allocation2 + $0x180] sm:$0xff]
    %v376 = vld [vmem:[#allocation2 + $0x188] sm:$0xff]
    %v377 = vld [vmem:[#allocation2 + $0x190] sm:$0xff]
    %v378 = vld [vmem:[#allocation2 + $0x198] sm:$0xff]
    %v379 = vld [vmem:[#allocation2 + $0x1a0] sm:$0xff]
    %v380 = vld [vmem:[#allocation2 + $0x1a8] sm:$0xff]
    %v381 = vld [vmem:[#allocation2 + $0x1b0] sm:$0xff]
    %v382 = vld [vmem:[#allocation2 + $0x1b8] sm:$0xff]
    %v383 = vld [vmem:[#allocation2 + $0x1c0] sm:$0xff]
    %v384 = vld [vmem:[#allocation2 + $0x1c8] sm:$0xff]
    %v385 = vld [vmem:[#allocation2 + $0x1d0] sm:$0xff]
    %v386 = vld [vmem:[#allocation2 + $0x1d8] sm:$0xff]
    %v387 = vld [vmem:[#allocation2 + $0x1e0] sm:$0xff]
    %v388 = vld [vmem:[#allocation2 + $0x1e8] sm:$0xff]
    %v389 = vld [vmem:[#allocation2 + $0x1f0] sm:$0xff]
    %v390 = vld [vmem:[#allocation2 + $0x1f8] sm:$0xff]
    %v391 = vld [vmem:[#allocation4] sm:$0xff]
    %v392 = vld [vmem:[#allocation4 + $0x8] sm:$0xff]
    %v393 = vld [vmem:[#allocation4 + $0x10] sm:$0xff]
    %v394 = vld [vmem:[#allocation4 + $0x18] sm:$0xff]
    %v395 = vld [vmem:[#allocation4 + $0x20] sm:$0xff]
    %v396 = vld [vmem:[#allocation4 + $0x28] sm:$0xff]
    %v397 = vld [vmem:[#allocation4 + $0x30] sm:$0xff]
    %v398 = vld [vmem:[#allocation4 + $0x38] sm:$0xff]
    %v399 = vld [vmem:[#allocation4 + $0x40] sm:$0xff]
    %v400 = vld [vmem:[#allocation4 + $0x48] sm:$0xff]
    %v401 = vld [vmem:[#allocation4 + $0x50] sm:$0xff]
    %v402 = vld [vmem:[#allocation4 + $0x58] sm:$0xff]
    %v403 = vld [vmem:[#allocation4 + $0x60] sm:$0xff]
    %v404 = vld [vmem:[#allocation4 + $0x68] sm:$0xff]
    %v405 = vld [vmem:[#allocation4 + $0x70] sm:$0xff]
    %v406 = vld [vmem:[#allocation4 + $0x78] sm:$0xff]
    %v407 = vld [vmem:[#allocation4 + $0x80] sm:$0xff]
    %v408 = vld [vmem:[#allocation4 + $0x88] sm:$0xff]
    %v409 = vld [vmem:[#allocation4 + $0x90] sm:$0xff]
    %v410 = vld [vmem:[#allocation4 + $0x98] sm:$0xff]
    %v411 = vld [vmem:[#allocation4 + $0xa0] sm:$0xff]
    %v412 = vld [vmem:[#allocation4 + $0xa8] sm:$0xff]
    %v413 = vld [vmem:[#allocation4 + $0xb0] sm:$0xff]
    %v414 = vld [vmem:[#allocation4 + $0xb8] sm:$0xff]
    %v415 = vld [vmem:[#allocation4 + $0xc0] sm:$0xff]
    %v416 = vld [vmem:[#allocation4 + $0xc8] sm:$0xff]
    %v417 = vld [vmem:[#allocation4 + $0xd0] sm:$0xff]
    %v418 = vld [vmem:[#allocation4 + $0xd8] sm:$0xff]
    %v419 = vld [vmem:[#allocation4 + $0xe0] sm:$0xff]
    %v420 = vld [vmem:[#allocation4 + $0xe8] sm:$0xff]
    %v421 = vld [vmem:[#allocation4 + $0xf0] sm:$0xff]
    %v422 = vld [vmem:[#allocation4 + $0xf8] sm:$0xff]
    %v423 = vld [vmem:[#allocation4 + $0x100] sm:$0xff]
    %v424 = vld [vmem:[#allocation4 + $0x108] sm:$0xff]
    %v425 = vld [vmem:[#allocation4 + $0x110] sm:$0xff]
    %v426 = vld [vmem:[#allocation4 + $0x118] sm:$0xff]
    %v427 = vld [vmem:[#allocation4 + $0x120] sm:$0xff]
    %v428 = vld [vmem:[#allocation4 + $0x128] sm:$0xff]
    %v429 = vld [vmem:[#allocation4 + $0x130] sm:$0xff]
    %v430 = vld [vmem:[#allocation4 + $0x138] sm:$0xff]
    %v431 = vld [vmem:[#allocation4 + $0x140] sm:$0xff]
    %v432 = vld [vmem:[#allocation4 + $0x148] sm:$0xff]
    %v433 = vld [vmem:[#allocation4 + $0x150] sm:$0xff]
    %v434 = vld [vmem:[#allocation4 + $0x158] sm:$0xff]
    %v435 = vld [vmem:[#allocation4 + $0x160] sm:$0xff]
    %v436 = vld [vmem:[#allocation4 + $0x168] sm:$0xff]
    %v437 = vld [vmem:[#allocation4 + $0x170] sm:$0xff]
    %v438 = vld [vmem:[#allocation4 + $0x178] sm:$0xff]
    %v439 = vld [vmem:[#allocation4 + $0x180] sm:$0xff]
    %v440 = vld [vmem:[#allocation4 + $0x188] sm:$0xff]
    %v441 = vld [vmem:[#allocation4 + $0x190] sm:$0xff]
    %v442 = vld [vmem:[#allocation4 + $0x198] sm:$0xff]
    %v443 = vld [vmem:[#allocation4 + $0x1a0] sm:$0xff]
    %v444 = vld [vmem:[#allocation4 + $0x1a8] sm:$0xff]
    %v445 = vld [vmem:[#allocation4 + $0x1b0] sm:$0xff]
    %v446 = vld [vmem:[#allocation4 + $0x1b8] sm:$0xff]
    %v447 = vld [vmem:[#allocation4 + $0x1c0] sm:$0xff]
    %v448 = vld [vmem:[#allocation4 + $0x1c8] sm:$0xff]
    %v449 = vld [vmem:[#allocation4 + $0x1d0] sm:$0xff]
    %v450 = vld [vmem:[#allocation4 + $0x1d8] sm:$0xff]
    %v451 = vld [vmem:[#allocation4 + $0x1e0] sm:$0xff]
    %v452 = vld [vmem:[#allocation4 + $0x1e8] sm:$0xff]
    %v453 = vld [vmem:[#allocation4 + $0x1f0] sm:$0xff]
    %v454 = vld [vmem:[#allocation4 + $0x1f8] sm:$0xff]
    %v523 = vunpack.c.l.b16 %v327
    %v524 = vunpack.c.h.b16 %v327
    %v525 = vunpack.c.l.b16 %v328
    %v526 = vunpack.c.h.b16 %v328
    %v527 = vunpack.c.l.b16 %v329
    %v528 = vunpack.c.h.b16 %v329
    %v529 = vunpack.c.l.b16 %v330
    %v530 = vunpack.c.h.b16 %v330
    %v531 = vunpack.c.l.b16 %v331
    %v532 = vunpack.c.h.b16 %v331
    %v533 = vunpack.c.l.b16 %v332
    %v534 = vunpack.c.h.b16 %v332
    %v535 = vunpack.c.l.b16 %v333
    %v536 = vunpack.c.h.b16 %v333
    %v537 = vunpack.c.l.b16 %v334
    %v538 = vunpack.c.h.b16 %v334
    %v539 = vunpack.c.l.b16 %v335
    %v540 = vunpack.c.h.b16 %v335
    %v541 = vunpack.c.l.b16 %v336
    %v542 = vunpack.c.h.b16 %v336
    %v543 = vunpack.c.l.b16 %v337
    %v544 = vunpack.c.h.b16 %v337
    %v545 = vunpack.c.l.b16 %v338
    %v546 = vunpack.c.h.b16 %v338
    %v547 = vunpack.c.l.b16 %v339
    %v548 = vunpack.c.h.b16 %v339
    %v549 = vunpack.c.l.b16 %v340
    %v550 = vunpack.c.h.b16 %v340
    %v551 = vunpack.c.l.b16 %v341
    %v552 = vunpack.c.h.b16 %v341
    %v553 = vunpack.c.l.b16 %v342
    %v554 = vunpack.c.h.b16 %v342
    %v555 = vunpack.c.l.b16 %v343
    %v556 = vunpack.c.h.b16 %v343
    %v557 = vunpack.c.l.b16 %v344
    %v558 = vunpack.c.h.b16 %v344
    %v559 = vunpack.c.l.b16 %v345
    %v560 = vunpack.c.h.b16 %v345
    %v561 = vunpack.c.l.b16 %v346
    %v562 = vunpack.c.h.b16 %v346
    %v563 = vunpack.c.l.b16 %v347
    %v564 = vunpack.c.h.b16 %v347
    %v565 = vunpack.c.l.b16 %v348
    %v566 = vunpack.c.h.b16 %v348
    %v567 = vunpack.c.l.b16 %v349
    %v568 = vunpack.c.h.b16 %v349
    %v569 = vunpack.c.l.b16 %v350
    %v570 = vunpack.c.h.b16 %v350
    %v571 = vunpack.c.l.b16 %v351
    %v572 = vunpack.c.h.b16 %v351
    %v573 = vunpack.c.l.b16 %v352
    %v574 = vunpack.c.h.b16 %v352
    %v575 = vunpack.c.l.b16 %v353
    %v576 = vunpack.c.h.b16 %v353
    %v577 = vunpack.c.l.b16 %v354
    %v578 = vunpack.c.h.b16 %v354
    %v579 = vunpack.c.l.b16 %v355
    %v580 = vunpack.c.h.b16 %v355
    %v581 = vunpack.c.l.b16 %v356
    %v582 = vunpack.c.h.b16 %v356
    %v583 = vunpack.c.l.b16 %v357
    %v584 = vunpack.c.h.b16 %v357
    %v585 = vunpack.c.l.b16 %v358
    %v586 = vunpack.c.h.b16 %v358
    %v587 = vunpack.c.l.b16 %v359
    %v588 = vunpack.c.h.b16 %v359
    %v589 = vunpack.c.l.b16 %v360
    %v590 = vunpack.c.h.b16 %v360
    %v591 = vunpack.c.l.b16 %v361
    %v592 = vunpack.c.h.b16 %v361
    %v593 = vunpack.c.l.b16 %v362
    %v594 = vunpack.c.h.b16 %v362
    %v595 = vunpack.c.l.b16 %v363
    %v596 = vunpack.c.h.b16 %v363
    %v597 = vunpack.c.l.b16 %v364
    %v598 = vunpack.c.h.b16 %v364
    %v599 = vunpack.c.l.b16 %v365
    %v600 = vunpack.c.h.b16 %v365
    %v601 = vunpack.c.l.b16 %v366
    %v602 = vunpack.c.h.b16 %v366
    %v603 = vunpack.c.l.b16 %v367
    %v604 = vunpack.c.h.b16 %v367
    %v605 = vunpack.c.l.b16 %v368
    %v606 = vunpack.c.h.b16 %v368
    %v607 = vunpack.c.l.b16 %v369
    %v608 = vunpack.c.h.b16 %v369
    %v609 = vunpack.c.l.b16 %v370
    %v610 = vunpack.c.h.b16 %v370
    %v611 = vunpack.c.l.b16 %v371
    %v612 = vunpack.c.h.b16 %v371
    %v613 = vunpack.c.l.b16 %v372
    %v614 = vunpack.c.h.b16 %v372
    %v615 = vunpack.c.l.b16 %v373
    %v616 = vunpack.c.h.b16 %v373
    %v617 = vunpack.c.l.b16 %v374
    %v618 = vunpack.c.h.b16 %v374
    %v619 = vunpack.c.l.b16 %v375
    %v620 = vunpack.c.h.b16 %v375
    %v621 = vunpack.c.l.b16 %v376
    %v622 = vunpack.c.h.b16 %v376
    %v623 = vunpack.c.l.b16 %v377
    %v624 = vunpack.c.h.b16 %v377
    %v625 = vunpack.c.l.b16 %v378
    %v626 = vunpack.c.h.b16 %v378
    %v627 = vunpack.c.l.b16 %v379
    %v628 = vunpack.c.h.b16 %v379
    %v629 = vunpack.c.l.b16 %v380
    %v630 = vunpack.c.h.b16 %v380
    %v631 = vunpack.c.l.b16 %v381
    %v632 = vunpack.c.h.b16 %v381
    %v633 = vunpack.c.l.b16 %v382
    %v634 = vunpack.c.h.b16 %v382
    %v635 = vunpack.c.l.b16 %v383
    %v636 = vunpack.c.h.b16 %v383
    %v637 = vunpack.c.l.b16 %v384
    %v638 = vunpack.c.h.b16 %v384
    %v639 = vunpack.c.l.b16 %v385
    %v640 = vunpack.c.h.b16 %v385
    %v641 = vunpack.c.l.b16 %v386
    %v642 = vunpack.c.h.b16 %v386
    %v643 = vunpack.c.l.b16 %v387
    %v644 = vunpack.c.h.b16 %v387
    %v645 = vunpack.c.l.b16 %v388
    %v646 = vunpack.c.h.b16 %v388
    %v647 = vunpack.c.l.b16 %v389
    %v648 = vunpack.c.h.b16 %v389
    %v649 = vunpack.c.l.b16 %v390
    %v650 = vunpack.c.h.b16 %v390
    %v651 = vpack.c.b16 %v525, %v523
    %v652 = vpack.c.b16 %v526, %v524
    %v653 = vpack.c.b16 %v529, %v527
    %v654 = vpack.c.b16 %v530, %v528
    %v655 = vpack.c.b16 %v533, %v531
    %v656 = vpack.c.b16 %v534, %v532
    %v657 = vpack.c.b16 %v537, %v535
    %v658 = vpack.c.b16 %v538, %v536
    %v659 = vpack.c.b16 %v541, %v539
    %v660 = vpack.c.b16 %v542, %v540
    %v661 = vpack.c.b16 %v545, %v543
    %v662 = vpack.c.b16 %v546, %v544
    %v663 = vpack.c.b16 %v549, %v547
    %v664 = vpack.c.b16 %v550, %v548
    %v665 = vpack.c.b16 %v553, %v551
    %v666 = vpack.c.b16 %v554, %v552
    %v667 = vpack.c.b16 %v557, %v555
    %v668 = vpack.c.b16 %v558, %v556
    %v669 = vpack.c.b16 %v561, %v559
    %v670 = vpack.c.b16 %v562, %v560
    %v671 = vpack.c.b16 %v565, %v563
    %v672 = vpack.c.b16 %v566, %v564
    %v673 = vpack.c.b16 %v569, %v567
    %v674 = vpack.c.b16 %v570, %v568
    %v675 = vpack.c.b16 %v573, %v571
    %v676 = vpack.c.b16 %v574, %v572
    %v677 = vpack.c.b16 %v577, %v575
    %v678 = vpack.c.b16 %v578, %v576
    %v679 = vpack.c.b16 %v581, %v579
    %v680 = vpack.c.b16 %v582, %v580
    %v681 = vpack.c.b16 %v585, %v583
    %v682 = vpack.c.b16 %v586, %v584
    %v683 = vpack.c.b16 %v589, %v587
    %v684 = vpack.c.b16 %v590, %v588
    %v685 = vpack.c.b16 %v593, %v591
    %v686 = vpack.c.b16 %v594, %v592
    %v687 = vpack.c.b16 %v597, %v595
    %v688 = vpack.c.b16 %v598, %v596
    %v689 = vpack.c.b16 %v601, %v599
    %v690 = vpack.c.b16 %v602, %v600
    %v691 = vpack.c.b16 %v605, %v603
    %v692 = vpack.c.b16 %v606, %v604
    %v693 = vpack.c.b16 %v609, %v607
    %v694 = vpack.c.b16 %v610, %v608
    %v695 = vpack.c.b16 %v613, %v611
    %v696 = vpack.c.b16 %v614, %v612
    %v697 = vpack.c.b16 %v617, %v615
    %v698 = vpack.c.b16 %v618, %v616
    %v699 = vpack.c.b16 %v621, %v619
    %v700 = vpack.c.b16 %v622, %v620
    %v701 = vpack.c.b16 %v625, %v623
    %v702 = vpack.c.b16 %v626, %v624
    %v703 = vpack.c.b16 %v629, %v627
    %v704 = vpack.c.b16 %v630, %v628
    %v705 = vpack.c.b16 %v633, %v631
    %v706 = vpack.c.b16 %v634, %v632
    %v707 = vpack.c.b16 %v637, %v635
    %v708 = vpack.c.b16 %v638, %v636
    %v709 = vpack.c.b16 %v641, %v639
    %v710 = vpack.c.b16 %v642, %v640
    %v711 = vpack.c.b16 %v645, %v643
    %v712 = vpack.c.b16 %v646, %v644
    %v713 = vpack.c.b16 %v649, %v647
    %v714 = vpack.c.b16 %v650, %v648
    %779 = vmatprep.subr.bf16.mxu0 %v652
    %780 = vmatpush1.bf16.msra.mxu0 %v651
    %781 = vmatprep.subr.bf16.mxu0 %v654
    %782 = vmatpush1.bf16.msra.mxu0 %v653
    %783 = vmatprep.subr.bf16.mxu0 %v656
    %784 = vmatpush1.bf16.msra.mxu0 %v655
    %785 = vmatprep.subr.bf16.mxu0 %v658
    %786 = vmatpush1.bf16.msra.mxu0 %v657
    %787 = vmatprep.subr.bf16.mxu0 %v660
    %788 = vmatpush1.bf16.msra.mxu0 %v659
    %789 = vmatprep.subr.bf16.mxu0 %v662
    %790 = vmatpush1.bf16.msra.mxu0 %v661
    %791 = vmatprep.subr.bf16.mxu0 %v664
    %792 = vmatpush1.bf16.msra.mxu0 %v663
    %793 = vmatprep.subr.bf16.mxu0 %v666
    %794 = vmatpush1.bf16.msra.mxu0 %v665
    %795 = vmatprep.subr.bf16.mxu0 %v668
    %796 = vmatpush1.bf16.msra.mxu0 %v667
    %797 = vmatprep.subr.bf16.mxu0 %v670
    %798 = vmatpush1.bf16.msra.mxu0 %v669
    %799 = vmatprep.subr.bf16.mxu0 %v672
    %800 = vmatpush1.bf16.msra.mxu0 %v671
    %801 = vmatprep.subr.bf16.mxu0 %v674
    %802 = vmatpush1.bf16.msra.mxu0 %v673
    %803 = vmatprep.subr.bf16.mxu0 %v676
    %804 = vmatpush1.bf16.msra.mxu0 %v675
    %805 = vmatprep.subr.bf16.mxu0 %v678
    %806 = vmatpush1.bf16.msra.mxu0 %v677
    %807 = vmatprep.subr.bf16.mxu0 %v680
    %808 = vmatpush1.bf16.msra.mxu0 %v679
    %809 = vmatprep.subr.bf16.mxu0 %v682
    %810 = vmatpush1.bf16.msra.mxu0 %v681
    %811 = vmatprep.mubr.bf16.mxu0 %v112
    %812 = vmatmul.mubr.bf16.gmra.mrb[0].mxu0 %v104
    %v813 = vpop.f32.mrb[0].mxu0
    %v814 = vadd.f32 0.0, %v813
    %v815 = vpop.f32.mrb[0].mxu0
    %v816 = vadd.f32 0.0, %v815
    %v817 = vpop.f32.mrb[0].mxu0
    %v818 = vpop.f32.mrb[0].mxu0
    %819 = vdwg.mxu0
    %820 = vmatprep.subr.bf16.mxu0 %v684
    %821 = vmatpush1.bf16.msra.mxu0 %v683
    %822 = vmatprep.subr.bf16.mxu0 %v686
    %823 = vmatpush1.bf16.msra.mxu0 %v685
    %824 = vmatprep.subr.bf16.mxu0 %v688
    %825 = vmatpush1.bf16.msra.mxu0 %v687
    %826 = vmatprep.subr.bf16.mxu0 %v690
    %827 = vmatpush1.bf16.msra.mxu0 %v689
    %828 = vmatprep.subr.bf16.mxu0 %v692
    %829 = vmatpush1.bf16.msra.mxu0 %v691
    %830 = vmatprep.subr.bf16.mxu0 %v694
    %831 = vmatpush1.bf16.msra.mxu0 %v693
    %832 = vmatprep.subr.bf16.mxu0 %v696
    %833 = vmatpush1.bf16.msra.mxu0 %v695
    %834 = vmatprep.subr.bf16.mxu0 %v698
    %835 = vmatpush1.bf16.msra.mxu0 %v697
    %836 = vmatprep.subr.bf16.mxu0 %v700
    %837 = vmatpush1.bf16.msra.mxu0 %v699
    %838 = vmatprep.subr.bf16.mxu0 %v702
    %839 = vmatpush1.bf16.msra.mxu0 %v701
    %840 = vmatprep.subr.bf16.mxu0 %v704
    %841 = vmatpush1.bf16.msra.mxu0 %v703
    %842 = vmatprep.subr.bf16.mxu0 %v706
    %843 = vmatpush1.bf16.msra.mxu0 %v705
    %844 = vmatprep.subr.bf16.mxu0 %v708
    %845 = vmatpush1.bf16.msra.mxu0 %v707
    %846 = vmatprep.subr.bf16.mxu0 %v710
    %847 = vmatpush1.bf16.msra.mxu0 %v709
    %848 = vmatprep.subr.bf16.mxu0 %v712
    %849 = vmatpush1.bf16.msra.mxu0 %v711
    %850 = vmatprep.subr.bf16.mxu0 %v714
    %851 = vmatpush1.bf16.msra.mxu0 %v713
    %852 = vmatprep.mubr.bf16.mxu0 %v113
    %853 = vmatmul.mubr.bf16.gmra.mrb[0].mxu0 %v111
    %v854 = vpop.f32.mrb[0].mxu0
    %v855 = vadd.f32 %v814, %v854
    %v856 = vpop.f32.mrb[0].mxu0
    %v857 = vadd.f32 %v816, %v856
    %v858 = vpop.f32.mrb[0].mxu0
    %v859 = vpop.f32.mrb[0].mxu0
    %860 = vdwg.mxu0
    %v861 = vpack.c.bf16 %v855, %v855
    %v862 = vpack.c.bf16 %v857, %v857
    %v864 = vsel %vm118, %v861, 0
    %v867 = vsel %vm118, %v862, 0
    %869 = vmatprep.subr.bf16.mxu0 %v867
    %870 = vmatpush1.bf16.msra.mxu0 %v864
    %871 = vmatprep.subr.bf16.mxu0 0
    %872 = vmatpush1.bf16.msra.mxu0 0
    %873 = vmatprep.subr.bf16.mxu0 0
    %874 = vmatpush1.bf16.msra.mxu0 0
    %875 = vmatprep.subr.bf16.mxu0 0
    %876 = vmatpush1.bf16.msra.mxu0 0
    %877 = vmatprep.subr.bf16.mxu0 0
    %878 = vmatpush1.bf16.msra.mxu0 0
    %879 = vmatprep.subr.bf16.mxu0 0
    %880 = vmatpush1.bf16.msra.mxu0 0
    %881 = vmatprep.subr.bf16.mxu0 0
    %882 = vmatpush1.bf16.msra.mxu0 0
    %883 = vmatprep.subr.bf16.mxu0 0
    %884 = vmatpush1.bf16.msra.mxu0 0
    %885 = vmatprep.subr.bf16.mxu0 0
    %886 = vmatpush1.bf16.msra.mxu0 0
    %887 = vmatprep.subr.bf16.mxu0 0
    %888 = vmatpush1.bf16.msra.mxu0 0
    %889 = vmatprep.subr.bf16.mxu0 0
    %890 = vmatpush1.bf16.msra.mxu0 0
    %891 = vmatprep.subr.bf16.mxu0 0
    %892 = vmatpush1.bf16.msra.mxu0 0
    %893 = vmatprep.subr.bf16.mxu0 0
    %894 = vmatpush1.bf16.msra.mxu0 0
    %895 = vmatprep.subr.bf16.mxu0 0
    %896 = vmatpush1.bf16.msra.mxu0 0
    %897 = vmatprep.subr.bf16.mxu0 0
    %898 = vmatpush1.bf16.msra.mxu0 0
    %899 = vmatprep.subr.bf16.mxu0 0
    %900 = vmatpush1.bf16.msra.mxu0 0
    %901 = vmatprep.mubr.bf16.mxu0 0
    %902 = vmatmul.mubr.bf16.gmra.mrb[0].mxu0 %v116
    %v903 = vpop.f32.mrb[0].mxu0
    %v904 = vadd.f32 %v94, %v903
    %v905 = vpop.f32.mrb[0].mxu0
    %v906 = vadd.f32 %v94, %v905
    %v907 = vpop.f32.mrb[0].mxu0
    %v908 = vpop.f32.mrb[0].mxu0
    %909 = vdwg.mxu0
    %v910 = vmax.f32 %v904, 0.0
    %v911 = vmax.f32 %v906, 0.0
    %v912 = vpack.c.bf16 %v910, %v910
    %v913 = vpack.c.bf16 %v911, %v911
    %v915 = vsel %vm232, %v912, 0
    %v918 = vsel %vm232, %v913, 0
    %920 = vmatprep.subr.bf16.mxu0 %v918
    %921 = vmatpush1.bf16.msra.mxu0 %v915
    %922 = vmatprep.subr.bf16.mxu0 0
    %923 = vmatpush1.bf16.msra.mxu0 0
    %924 = vmatprep.subr.bf16.mxu0 0
    %925 = vmatpush1.bf16.msra.mxu0 0
    %926 = vmatprep.subr.bf16.mxu0 0
    %927 = vmatpush1.bf16.msra.mxu0 0
    %928 = vmatprep.subr.bf16.mxu0 0
    %929 = vmatpush1.bf16.msra.mxu0 0
    %930 = vmatprep.subr.bf16.mxu0 0
    %931 = vmatpush1.bf16.msra.mxu0 0
    %932 = vmatprep.subr.bf16.mxu0 0
    %933 = vmatpush1.bf16.msra.mxu0 0
    %934 = vmatprep.subr.bf16.mxu0 0
    %935 = vmatpush1.bf16.msra.mxu0 0
    %936 = vmatprep.subr.bf16.mxu0 0
    %937 = vmatpush1.bf16.msra.mxu0 0
    %938 = vmatprep.subr.bf16.mxu0 0
    %939 = vmatpush1.bf16.msra.mxu0 0
    %940 = vmatprep.subr.bf16.mxu0 0
    %941 = vmatpush1.bf16.msra.mxu0 0
    %942 = vmatprep.subr.bf16.mxu0 0
    %943 = vmatpush1.bf16.msra.mxu0 0
    %944 = vmatprep.subr.bf16.mxu0 0
    %945 = vmatpush1.bf16.msra.mxu0 0
    %946 = vmatprep.subr.bf16.mxu0 0
    %947 = vmatpush1.bf16.msra.mxu0 0
    %948 = vmatprep.subr.bf16.mxu0 0
    %949 = vmatpush1.bf16.msra.mxu0 0
    %950 = vmatprep.subr.bf16.mxu0 0
    %951 = vmatpush1.bf16.msra.mxu0 0
    %952 = vmatprep.mubr.bf16.mxu0 0
    %953 = vmatmul.mubr.bf16.gmra.mrb[0].mxu0 %v230
    %v954 = vpop.f32.mrb[0].mxu0
    %v955 = vadd.f32 %v226, %v954
    %v956 = vpop.f32.mrb[0].mxu0
    %v957 = vadd.f32 %v226, %v956
    %v958 = vpop.f32.mrb[0].mxu0
    %v959 = vpop.f32.mrb[0].mxu0
    %960 = vdwg.mxu0
    %v961 = vpack.c.bf16 %v955, %v955
    %v962 = vpack.c.bf16 %v957, %v957
    %v1027 = vunpack.c.l.b16 %v391
    %v1028 = vunpack.c.h.b16 %v391
    %v1029 = vunpack.c.l.b16 %v392
    %v1030 = vunpack.c.h.b16 %v392
    %v1031 = vunpack.c.l.b16 %v393
    %v1032 = vunpack.c.h.b16 %v393
    %v1033 = vunpack.c.l.b16 %v394
    %v1034 = vunpack.c.h.b16 %v394
    %v1035 = vunpack.c.l.b16 %v395
    %v1036 = vunpack.c.h.b16 %v395
    %v1037 = vunpack.c.l.b16 %v396
    %v1038 = vunpack.c.h.b16 %v396
    %v1039 = vunpack.c.l.b16 %v397
    %v1040 = vunpack.c.h.b16 %v397
    %v1041 = vunpack.c.l.b16 %v398
    %v1042 = vunpack.c.h.b16 %v398
    %v1043 = vunpack.c.l.b16 %v399
    %v1044 = vunpack.c.h.b16 %v399
    %v1045 = vunpack.c.l.b16 %v400
    %v1046 = vunpack.c.h.b16 %v400
    %v1047 = vunpack.c.l.b16 %v401
    %v1048 = vunpack.c.h.b16 %v401
    %v1049 = vunpack.c.l.b16 %v402
    %v1050 = vunpack.c.h.b16 %v402
    %v1051 = vunpack.c.l.b16 %v403
    %v1052 = vunpack.c.h.b16 %v403
    %v1053 = vunpack.c.l.b16 %v404
    %v1054 = vunpack.c.h.b16 %v404
    %v1055 = vunpack.c.l.b16 %v405
    %v1056 = vunpack.c.h.b16 %v405
    %v1057 = vunpack.c.l.b16 %v406
    %v1058 = vunpack.c.h.b16 %v406
    %v1059 = vunpack.c.l.b16 %v407
    %v1060 = vunpack.c.h.b16 %v407
    %v1061 = vunpack.c.l.b16 %v408
    %v1062 = vunpack.c.h.b16 %v408
    %v1063 = vunpack.c.l.b16 %v409
    %v1064 = vunpack.c.h.b16 %v409
    %v1065 = vunpack.c.l.b16 %v410
    %v1066 = vunpack.c.h.b16 %v410
    %v1067 = vunpack.c.l.b16 %v411
    %v1068 = vunpack.c.h.b16 %v411
    %v1069 = vunpack.c.l.b16 %v412
    %v1070 = vunpack.c.h.b16 %v412
    %v1071 = vunpack.c.l.b16 %v413
    %v1072 = vunpack.c.h.b16 %v413
    %v1073 = vunpack.c.l.b16 %v414
    %v1074 = vunpack.c.h.b16 %v414
    %v1075 = vunpack.c.l.b16 %v415
    %v1076 = vunpack.c.h.b16 %v415
    %v1077 = vunpack.c.l.b16 %v416
    %v1078 = vunpack.c.h.b16 %v416
    %v1079 = vunpack.c.l.b16 %v417
    %v1080 = vunpack.c.h.b16 %v417
    %v1081 = vunpack.c.l.b16 %v418
    %v1082 = vunpack.c.h.b16 %v418
    %v1083 = vunpack.c.l.b16 %v419
    %v1084 = vunpack.c.h.b16 %v419
    %v1085 = vunpack.c.l.b16 %v420
    %v1086 = vunpack.c.h.b16 %v420
    %v1087 = vunpack.c.l.b16 %v421
    %v1088 = vunpack.c.h.b16 %v421
    %v1089 = vunpack.c.l.b16 %v422
    %v1090 = vunpack.c.h.b16 %v422
    %v1091 = vunpack.c.l.b16 %v423
    %v1092 = vunpack.c.h.b16 %v423
    %v1093 = vunpack.c.l.b16 %v424
    %v1094 = vunpack.c.h.b16 %v424
    %v1095 = vunpack.c.l.b16 %v425
    %v1096 = vunpack.c.h.b16 %v425
    %v1097 = vunpack.c.l.b16 %v426
    %v1098 = vunpack.c.h.b16 %v426
    %v1099 = vunpack.c.l.b16 %v427
    %v1100 = vunpack.c.h.b16 %v427
    %v1101 = vunpack.c.l.b16 %v428
    %v1102 = vunpack.c.h.b16 %v428
    %v1103 = vunpack.c.l.b16 %v429
    %v1104 = vunpack.c.h.b16 %v429
    %v1105 = vunpack.c.l.b16 %v430
    %v1106 = vunpack.c.h.b16 %v430
    %v1107 = vunpack.c.l.b16 %v431
    %v1108 = vunpack.c.h.b16 %v431
    %v1109 = vunpack.c.l.b16 %v432
    %v1110 = vunpack.c.h.b16 %v432
    %v1111 = vunpack.c.l.b16 %v433
    %v1112 = vunpack.c.h.b16 %v433
    %v1113 = vunpack.c.l.b16 %v434
    %v1114 = vunpack.c.h.b16 %v434
    %v1115 = vunpack.c.l.b16 %v435
    %v1116 = vunpack.c.h.b16 %v435
    %v1117 = vunpack.c.l.b16 %v436
    %v1118 = vunpack.c.h.b16 %v436
    %v1119 = vunpack.c.l.b16 %v437
    %v1120 = vunpack.c.h.b16 %v437
    %v1121 = vunpack.c.l.b16 %v438
    %v1122 = vunpack.c.h.b16 %v438
    %v1123 = vunpack.c.l.b16 %v439
    %v1124 = vunpack.c.h.b16 %v439
    %v1125 = vunpack.c.l.b16 %v440
    %v1126 = vunpack.c.h.b16 %v440
    %v1127 = vunpack.c.l.b16 %v441
    %v1128 = vunpack.c.h.b16 %v441
    %v1129 = vunpack.c.l.b16 %v442
    %v1130 = vunpack.c.h.b16 %v442
    %v1131 = vunpack.c.l.b16 %v443
    %v1132 = vunpack.c.h.b16 %v443
    %v1133 = vunpack.c.l.b16 %v444
    %v1134 = vunpack.c.h.b16 %v444
    %v1135 = vunpack.c.l.b16 %v445
    %v1136 = vunpack.c.h.b16 %v445
    %v1137 = vunpack.c.l.b16 %v446
    %v1138 = vunpack.c.h.b16 %v446
    %v1139 = vunpack.c.l.b16 %v447
    %v1140 = vunpack.c.h.b16 %v447
    %v1141 = vunpack.c.l.b16 %v448
    %v1142 = vunpack.c.h.b16 %v448
    %v1143 = vunpack.c.l.b16 %v449
    %v1144 = vunpack.c.h.b16 %v449
    %v1145 = vunpack.c.l.b16 %v450
    %v1146 = vunpack.c.h.b16 %v450
    %v1147 = vunpack.c.l.b16 %v451
    %v1148 = vunpack.c.h.b16 %v451
    %v1149 = vunpack.c.l.b16 %v452
    %v1150 = vunpack.c.h.b16 %v452
    %v1151 = vunpack.c.l.b16 %v453
    %v1152 = vunpack.c.h.b16 %v453
    %v1153 = vunpack.c.l.b16 %v454
    %v1154 = vunpack.c.h.b16 %v454
    %v1155 = vpack.c.b16 %v1031, %v1027
    %v1156 = vpack.c.b16 %v1032, %v1028
    %v1157 = vpack.c.b16 %v1033, %v1029
    %v1158 = vpack.c.b16 %v1034, %v1030
    %v1159 = vpack.c.b16 %v1039, %v1035
    %v1160 = vpack.c.b16 %v1040, %v1036
    %v1161 = vpack.c.b16 %v1041, %v1037
    %v1162 = vpack.c.b16 %v1042, %v1038
    %v1163 = vpack.c.b16 %v1047, %v1043
    %v1164 = vpack.c.b16 %v1048, %v1044
    %v1165 = vpack.c.b16 %v1049, %v1045
    %v1166 = vpack.c.b16 %v1050, %v1046
    %v1167 = vpack.c.b16 %v1055, %v1051
    %v1168 = vpack.c.b16 %v1056, %v1052
    %v1169 = vpack.c.b16 %v1057, %v1053
    %v1170 = vpack.c.b16 %v1058, %v1054
    %v1171 = vpack.c.b16 %v1063, %v1059
    %v1172 = vpack.c.b16 %v1064, %v1060
    %v1173 = vpack.c.b16 %v1065, %v1061
    %v1174 = vpack.c.b16 %v1066, %v1062
    %v1175 = vpack.c.b16 %v1071, %v1067
    %v1176 = vpack.c.b16 %v1072, %v1068
    %v1177 = vpack.c.b16 %v1073, %v1069
    %v1178 = vpack.c.b16 %v1074, %v1070
    %v1179 = vpack.c.b16 %v1079, %v1075
    %v1180 = vpack.c.b16 %v1080, %v1076
    %v1181 = vpack.c.b16 %v1081, %v1077
    %v1182 = vpack.c.b16 %v1082, %v1078
    %v1183 = vpack.c.b16 %v1087, %v1083
    %v1184 = vpack.c.b16 %v1088, %v1084
    %v1185 = vpack.c.b16 %v1089, %v1085
    %v1186 = vpack.c.b16 %v1090, %v1086
    %v1187 = vpack.c.b16 %v1095, %v1091
    %v1188 = vpack.c.b16 %v1096, %v1092
    %v1189 = vpack.c.b16 %v1097, %v1093
    %v1190 = vpack.c.b16 %v1098, %v1094
    %v1191 = vpack.c.b16 %v1103, %v1099
    %v1192 = vpack.c.b16 %v1104, %v1100
    %v1193 = vpack.c.b16 %v1105, %v1101
    %v1194 = vpack.c.b16 %v1106, %v1102
    %v1195 = vpack.c.b16 %v1111, %v1107
    %v1196 = vpack.c.b16 %v1112, %v1108
    %v1197 = vpack.c.b16 %v1113, %v1109
    %v1198 = vpack.c.b16 %v1114, %v1110
    %v1199 = vpack.c.b16 %v1119, %v1115
    %v1200 = vpack.c.b16 %v1120, %v1116
    %v1201 = vpack.c.b16 %v1121, %v1117
    %v1202 = vpack.c.b16 %v1122, %v1118
    %v1203 = vpack.c.b16 %v1127, %v1123
    %v1204 = vpack.c.b16 %v1128, %v1124
    %v1205 = vpack.c.b16 %v1129, %v1125
    %v1206 = vpack.c.b16 %v1130, %v1126
    %v1207 = vpack.c.b16 %v1135, %v1131
    %v1208 = vpack.c.b16 %v1136, %v1132
    %v1209 = vpack.c.b16 %v1137, %v1133
    %v1210 = vpack.c.b16 %v1138, %v1134
    %v1211 = vpack.c.b16 %v1143, %v1139
    %v1212 = vpack.c.b16 %v1144, %v1140
    %v1213 = vpack.c.b16 %v1145, %v1141
    %v1214 = vpack.c.b16 %v1146, %v1142
    %v1215 = vpack.c.b16 %v1151, %v1147
    %v1216 = vpack.c.b16 %v1152, %v1148
    %v1217 = vpack.c.b16 %v1153, %v1149
    %v1218 = vpack.c.b16 %v1154, %v1150
    %1283 = vmatprep.subr.bf16.mxu0 %v1156
    %1284 = vmatpush1.bf16.msra.mxu0 %v1155
    %1285 = vmatprep.subr.bf16.mxu0 %v1160
    %1286 = vmatpush1.bf16.msra.mxu0 %v1159
    %1287 = vmatprep.subr.bf16.mxu0 %v1164
    %1288 = vmatpush1.bf16.msra.mxu0 %v1163
    %1289 = vmatprep.subr.bf16.mxu0 %v1168
    %1290 = vmatpush1.bf16.msra.mxu0 %v1167
    %1291 = vmatprep.subr.bf16.mxu0 %v1172
    %1292 = vmatpush1.bf16.msra.mxu0 %v1171
    %1293 = vmatprep.subr.bf16.mxu0 %v1176
    %1294 = vmatpush1.bf16.msra.mxu0 %v1175
    %1295 = vmatprep.subr.bf16.mxu0 %v1180
    %1296 = vmatpush1.bf16.msra.mxu0 %v1179
    %1297 = vmatprep.subr.bf16.mxu0 %v1184
    %1298 = vmatpush1.bf16.msra.mxu0 %v1183
    %1299 = vmatprep.subr.bf16.mxu0 %v1188
    %1300 = vmatpush1.bf16.msra.mxu0 %v1187
    %1301 = vmatprep.subr.bf16.mxu0 %v1192
    %1302 = vmatpush1.bf16.msra.mxu0 %v1191
    %1303 = vmatprep.subr.bf16.mxu0 %v1196
    %1304 = vmatpush1.bf16.msra.mxu0 %v1195
    %1305 = vmatprep.subr.bf16.mxu0 %v1200
    %1306 = vmatpush1.bf16.msra.mxu0 %v1199
    %1307 = vmatprep.subr.bf16.mxu0 %v1204
    %1308 = vmatpush1.bf16.msra.mxu0 %v1203
    %1309 = vmatprep.subr.bf16.mxu0 %v1208
    %1310 = vmatpush1.bf16.msra.mxu0 %v1207
    %1311 = vmatprep.subr.bf16.mxu0 %v1212
    %1312 = vmatpush1.bf16.msra.mxu0 %v1211
    %1313 = vmatprep.subr.bf16.mxu0 %v1216
    %1314 = vmatpush1.bf16.msra.mxu0 %v1215
    %1315 = vmatprep.mubr.bf16.mxu0 %v962
    %1316 = vmatmul.mubr.bf16.gmra.mrb[0].mxu0 %v961
    %v1317 = vpop.f32.mrb[0].mxu0
    %v1318 = vadd.f32 0.0, %v1317
    %v1319 = vpop.f32.mrb[0].mxu0
    %v1320 = vadd.f32 0.0, %v1319
    %v1321 = vpop.f32.mrb[0].mxu0
    %v1322 = vpop.f32.mrb[0].mxu0
    %1323 = vdwg.mxu0
    %1324 = vmatprep.subr.bf16.mxu0 %v1158
    %1325 = vmatpush1.bf16.msra.mxu0 %v1157
    %1326 = vmatprep.subr.bf16.mxu0 %v1162
    %1327 = vmatpush1.bf16.msra.mxu0 %v1161
    %1328 = vmatprep.subr.bf16.mxu0 %v1166
    %1329 = vmatpush1.bf16.msra.mxu0 %v1165
    %1330 = vmatprep.subr.bf16.mxu0 %v1170
    %1331 = vmatpush1.bf16.msra.mxu0 %v1169
    %1332 = vmatprep.subr.bf16.mxu0 %v1174
    %1333 = vmatpush1.bf16.msra.mxu0 %v1173
    %1334 = vmatprep.subr.bf16.mxu0 %v1178
    %1335 = vmatpush1.bf16.msra.mxu0 %v1177
    %1336 = vmatprep.subr.bf16.mxu0 %v1182
    %1337 = vmatpush1.bf16.msra.mxu0 %v1181
    %1338 = vmatprep.subr.bf16.mxu0 %v1186
    %1339 = vmatpush1.bf16.msra.mxu0 %v1185
    %1340 = vmatprep.subr.bf16.mxu0 %v1190
    %1341 = vmatpush1.bf16.msra.mxu0 %v1189
    %1342 = vmatprep.subr.bf16.mxu0 %v1194
    %1343 = vmatpush1.bf16.msra.mxu0 %v1193
    %1344 = vmatprep.subr.bf16.mxu0 %v1198
    %1345 = vmatpush1.bf16.msra.mxu0 %v1197
    %1346 = vmatprep.subr.bf16.mxu0 %v1202
    %1347 = vmatpush1.bf16.msra.mxu0 %v1201
    %1348 = vmatprep.subr.bf16.mxu0 %v1206
    %1349 = vmatpush1.bf16.msra.mxu0 %v1205
    %1350 = vmatprep.subr.bf16.mxu0 %v1210
    %1351 = vmatpush1.bf16.msra.mxu0 %v1209
    %1352 = vmatprep.subr.bf16.mxu0 %v1214
    %1353 = vmatpush1.bf16.msra.mxu0 %v1213
    %1354 = vmatprep.subr.bf16.mxu0 %v1218
    %1355 = vmatpush1.bf16.msra.mxu0 %v1217
    %1356 = vmatprep.mubr.bf16.mxu0 %v962
    %1357 = vmatmul.mubr.bf16.gmra.mrb[0].mxu0 %v961
    %v1358 = vpop.f32.mrb[0].mxu0
    %v1359 = vadd.f32 0.0, %v1358
    %v1360 = vpop.f32.mrb[0].mxu0
    %v1361 = vadd.f32 0.0, %v1360
    %v1362 = vpop.f32.mrb[0].mxu0
    %v1363 = vpop.f32.mrb[0].mxu0
    %1364 = vdwg.mxu0
    %v1365 = vmax.f32 %v280, %v1318
    %v1366 = vmax.f32 %v282, %v1320
    %v1367 = vmax.f32 %v321, %v1359
    %v1368 = vmax.f32 %v323, %v1361
    %v1369 = vld [vmem:[#allocation6] sm:$0xff]
    %v1370 = vld [vmem:[#allocation6 + $0x8] sm:$0xff]
    %v1371 = vld [vmem:[#allocation6 + $0x10] sm:$0xff]
    %v1372 = vld [vmem:[#allocation6 + $0x18] sm:$0xff]
    %v1373 = vld [vmem:[#allocation6 + $0x20] sm:$0xff]
    %v1374 = vld [vmem:[#allocation6 + $0x28] sm:$0xff]
    %v1375 = vld [vmem:[#allocation6 + $0x30] sm:$0xff]
    %v1376 = vld [vmem:[#allocation6 + $0x38] sm:$0xff]
    %v1377 = vld [vmem:[#allocation6 + $0x40] sm:$0xff]
    %v1378 = vld [vmem:[#allocation6 + $0x48] sm:$0xff]
    %v1379 = vld [vmem:[#allocation6 + $0x50] sm:$0xff]
    %v1380 = vld [vmem:[#allocation6 + $0x58] sm:$0xff]
    %v1381 = vld [vmem:[#allocation6 + $0x60] sm:$0xff]
    %v1382 = vld [vmem:[#allocation6 + $0x68] sm:$0xff]
    %v1383 = vld [vmem:[#allocation6 + $0x70] sm:$0xff]
    %v1384 = vld [vmem:[#allocation6 + $0x78] sm:$0xff]
    %v1385 = vld [vmem:[#allocation6 + $0x80] sm:$0xff]
    %v1386 = vld [vmem:[#allocation6 + $0x88] sm:$0xff]
    %v1387 = vld [vmem:[#allocation6 + $0x90] sm:$0xff]
    %v1388 = vld [vmem:[#allocation6 + $0x98] sm:$0xff]
    %v1389 = vld [vmem:[#allocation6 + $0xa0] sm:$0xff]
    %v1390 = vld [vmem:[#allocation6 + $0xa8] sm:$0xff]
    %v1391 = vld [vmem:[#allocation6 + $0xb0] sm:$0xff]
    %v1392 = vld [vmem:[#allocation6 + $0xb8] sm:$0xff]
    %v1393 = vld [vmem:[#allocation6 + $0xc0] sm:$0xff]
    %v1394 = vld [vmem:[#allocation6 + $0xc8] sm:$0xff]
    %v1395 = vld [vmem:[#allocation6 + $0xd0] sm:$0xff]
    %v1396 = vld [vmem:[#allocation6 + $0xd8] sm:$0xff]
    %v1397 = vld [vmem:[#allocation6 + $0xe0] sm:$0xff]
    %v1398 = vld [vmem:[#allocation6 + $0xe8] sm:$0xff]
    %v1399 = vld [vmem:[#allocation6 + $0xf0] sm:$0xff]
    %v1400 = vld [vmem:[#allocation6 + $0xf8] sm:$0xff]
    %v1401 = vld [vmem:[#allocation6 + $0x100] sm:$0xff]
    %v1402 = vld [vmem:[#allocation6 + $0x108] sm:$0xff]
    %v1403 = vld [vmem:[#allocation6 + $0x110] sm:$0xff]
    %v1404 = vld [vmem:[#allocation6 + $0x118] sm:$0xff]
    %v1405 = vld [vmem:[#allocation6 + $0x120] sm:$0xff]
    %v1406 = vld [vmem:[#allocation6 + $0x128] sm:$0xff]
    %v1407 = vld [vmem:[#allocation6 + $0x130] sm:$0xff]
    %v1408 = vld [vmem:[#allocation6 + $0x138] sm:$0xff]
    %v1409 = vld [vmem:[#allocation6 + $0x140] sm:$0xff]
    %v1410 = vld [vmem:[#allocation6 + $0x148] sm:$0xff]
    %v1411 = vld [vmem:[#allocation6 + $0x150] sm:$0xff]
    %v1412 = vld [vmem:[#allocation6 + $0x158] sm:$0xff]
    %v1413 = vld [vmem:[#allocation6 + $0x160] sm:$0xff]
    %v1414 = vld [vmem:[#allocation6 + $0x168] sm:$0xff]
    %v1415 = vld [vmem:[#allocation6 + $0x170] sm:$0xff]
    %v1416 = vld [vmem:[#allocation6 + $0x178] sm:$0xff]
    %v1417 = vld [vmem:[#allocation6 + $0x180] sm:$0xff]
    %v1418 = vld [vmem:[#allocation6 + $0x188] sm:$0xff]
    %v1419 = vld [vmem:[#allocation6 + $0x190] sm:$0xff]
    %v1420 = vld [vmem:[#allocation6 + $0x198] sm:$0xff]
    %v1421 = vld [vmem:[#allocation6 + $0x1a0] sm:$0xff]
    %v1422 = vld [vmem:[#allocation6 + $0x1a8] sm:$0xff]
    %v1423 = vld [vmem:[#allocation6 + $0x1b0] sm:$0xff]
    %v1424 = vld [vmem:[#allocation6 + $0x1b8] sm:$0xff]
    %v1425 = vld [vmem:[#allocation6 + $0x1c0] sm:$0xff]
    %v1426 = vld [vmem:[#allocation6 + $0x1c8] sm:$0xff]
    %v1427 = vld [vmem:[#allocation6 + $0x1d0] sm:$0xff]
    %v1428 = vld [vmem:[#allocation6 + $0x1d8] sm:$0xff]
    %v1429 = vld [vmem:[#allocation6 + $0x1e0] sm:$0xff]
    %v1430 = vld [vmem:[#allocation6 + $0x1e8] sm:$0xff]
    %v1431 = vld [vmem:[#allocation6 + $0x1f0] sm:$0xff]
    %v1432 = vld [vmem:[#allocation6 + $0x1f8] sm:$0xff]
    %v1433 = vld [vmem:[#allocation6 + $0x200] sm:$0xff]
    %v1434 = vld [vmem:[#allocation6 + $0x208] sm:$0xff]
    %v1435 = vld [vmem:[#allocation6 + $0x210] sm:$0xff]
    %v1436 = vld [vmem:[#allocation6 + $0x218] sm:$0xff]
    %v1437 = vld [vmem:[#allocation6 + $0x220] sm:$0xff]
    %v1438 = vld [vmem:[#allocation6 + $0x228] sm:$0xff]
    %v1439 = vld [vmem:[#allocation6 + $0x230] sm:$0xff]
    %v1440 = vld [vmem:[#allocation6 + $0x238] sm:$0xff]
    %v1441 = vld [vmem:[#allocation6 + $0x240] sm:$0xff]
    %v1442 = vld [vmem:[#allocation6 + $0x248] sm:$0xff]
    %v1443 = vld [vmem:[#allocation6 + $0x250] sm:$0xff]
    %v1444 = vld [vmem:[#allocation6 + $0x258] sm:$0xff]
    %v1445 = vld [vmem:[#allocation6 + $0x260] sm:$0xff]
    %v1446 = vld [vmem:[#allocation6 + $0x268] sm:$0xff]
    %v1447 = vld [vmem:[#allocation6 + $0x270] sm:$0xff]
    %v1448 = vld [vmem:[#allocation6 + $0x278] sm:$0xff]
    %v1449 = vld [vmem:[#allocation6 + $0x280] sm:$0xff]
    %v1450 = vld [vmem:[#allocation6 + $0x288] sm:$0xff]
    %v1451 = vld [vmem:[#allocation6 + $0x290] sm:$0xff]
    %v1452 = vld [vmem:[#allocation6 + $0x298] sm:$0xff]
    %v1453 = vld [vmem:[#allocation6 + $0x2a0] sm:$0xff]
    %v1454 = vld [vmem:[#allocation6 + $0x2a8] sm:$0xff]
    %v1455 = vld [vmem:[#allocation6 + $0x2b0] sm:$0xff]
    %v1456 = vld [vmem:[#allocation6 + $0x2b8] sm:$0xff]
    %v1457 = vld [vmem:[#allocation6 + $0x2c0] sm:$0xff]
    %v1458 = vld [vmem:[#allocation6 + $0x2c8] sm:$0xff]
    %v1459 = vld [vmem:[#allocation6 + $0x2d0] sm:$0xff]
    %v1460 = vld [vmem:[#allocation6 + $0x2d8] sm:$0xff]
    %v1461 = vld [vmem:[#allocation6 + $0x2e0] sm:$0xff]
    %v1462 = vld [vmem:[#allocation6 + $0x2e8] sm:$0xff]
    %v1463 = vld [vmem:[#allocation6 + $0x2f0] sm:$0xff]
    %v1464 = vld [vmem:[#allocation6 + $0x2f8] sm:$0xff]
    %v1465 = vld [vmem:[#allocation6 + $0x300] sm:$0xff]
    %v1466 = vld [vmem:[#allocation6 + $0x308] sm:$0xff]
    %v1467 = vld [vmem:[#allocation6 + $0x310] sm:$0xff]
    %v1468 = vld [vmem:[#allocation6 + $0x318] sm:$0xff]
    %v1469 = vld [vmem:[#allocation6 + $0x320] sm:$0xff]
    %v1470 = vld [vmem:[#allocation6 + $0x328] sm:$0xff]
    %v1471 = vld [vmem:[#allocation6 + $0x330] sm:$0xff]
    %v1472 = vld [vmem:[#allocation6 + $0x338] sm:$0xff]
    %v1473 = vld [vmem:[#allocation6 + $0x340] sm:$0xff]
    %v1474 = vld [vmem:[#allocation6 + $0x348] sm:$0xff]
    %v1475 = vld [vmem:[#allocation6 + $0x350] sm:$0xff]
    %v1476 = vld [vmem:[#allocation6 + $0x358] sm:$0xff]
    %v1477 = vld [vmem:[#allocation6 + $0x360] sm:$0xff]
    %v1478 = vld [vmem:[#allocation6 + $0x368] sm:$0xff]
    %v1479 = vld [vmem:[#allocation6 + $0x370] sm:$0xff]
    %v1480 = vld [vmem:[#allocation6 + $0x378] sm:$0xff]
    %v1481 = vld [vmem:[#allocation6 + $0x380] sm:$0xff]
    %v1482 = vld [vmem:[#allocation6 + $0x388] sm:$0xff]
    %v1483 = vld [vmem:[#allocation6 + $0x390] sm:$0xff]
    %v1484 = vld [vmem:[#allocation6 + $0x398] sm:$0xff]
    %v1485 = vld [vmem:[#allocation6 + $0x3a0] sm:$0xff]
    %v1486 = vld [vmem:[#allocation6 + $0x3a8] sm:$0xff]
    %v1487 = vld [vmem:[#allocation6 + $0x3b0] sm:$0xff]
    %v1488 = vld [vmem:[#allocation6 + $0x3b8] sm:$0xff]
    %v1489 = vld [vmem:[#allocation6 + $0x3c0] sm:$0xff]
    %v1490 = vld [vmem:[#allocation6 + $0x3c8] sm:$0xff]
    %v1491 = vld [vmem:[#allocation6 + $0x3d0] sm:$0xff]
    %v1492 = vld [vmem:[#allocation6 + $0x3d8] sm:$0xff]
    %v1493 = vld [vmem:[#allocation6 + $0x3e0] sm:$0xff]
    %v1494 = vld [vmem:[#allocation6 + $0x3e8] sm:$0xff]
    %v1495 = vld [vmem:[#allocation6 + $0x3f0] sm:$0xff]
    %v1496 = vld [vmem:[#allocation6 + $0x3f8] sm:$0xff]
    %v1497 = vld [vmem:[#allocation7] sm:$0xff]
    %v1498 = vld [vmem:[#allocation7 + $0x8] sm:$0xff]
    %v1499 = vld [vmem:[#allocation7 + $0x10] sm:$0xff]
    %v1500 = vld [vmem:[#allocation7 + $0x18] sm:$0xff]
    %v1501 = vld [vmem:[#allocation7 + $0x20] sm:$0xff]
    %v1502 = vld [vmem:[#allocation7 + $0x28] sm:$0xff]
    %v1503 = vld [vmem:[#allocation7 + $0x30] sm:$0xff]
    %v1504 = vld [vmem:[#allocation7 + $0x38] sm:$0xff]
    %v1505 = vld [vmem:[#allocation7 + $0x40] sm:$0xff]
    %v1506 = vld [vmem:[#allocation7 + $0x48] sm:$0xff]
    %v1507 = vld [vmem:[#allocation7 + $0x50] sm:$0xff]
    %v1508 = vld [vmem:[#allocation7 + $0x58] sm:$0xff]
    %v1509 = vld [vmem:[#allocation7 + $0x60] sm:$0xff]
    %v1510 = vld [vmem:[#allocation7 + $0x68] sm:$0xff]
    %v1511 = vld [vmem:[#allocation7 + $0x70] sm:$0xff]
    %v1512 = vld [vmem:[#allocation7 + $0x78] sm:$0xff]
    %v1513 = vld [vmem:[#allocation7 + $0x80] sm:$0xff]
    %v1514 = vld [vmem:[#allocation7 + $0x88] sm:$0xff]
    %v1515 = vld [vmem:[#allocation7 + $0x90] sm:$0xff]
    %v1516 = vld [vmem:[#allocation7 + $0x98] sm:$0xff]
    %v1517 = vld [vmem:[#allocation7 + $0xa0] sm:$0xff]
    %v1518 = vld [vmem:[#allocation7 + $0xa8] sm:$0xff]
    %v1519 = vld [vmem:[#allocation7 + $0xb0] sm:$0xff]
    %v1520 = vld [vmem:[#allocation7 + $0xb8] sm:$0xff]
    %v1521 = vld [vmem:[#allocation7 + $0xc0] sm:$0xff]
    %v1522 = vld [vmem:[#allocation7 + $0xc8] sm:$0xff]
    %v1523 = vld [vmem:[#allocation7 + $0xd0] sm:$0xff]
    %v1524 = vld [vmem:[#allocation7 + $0xd8] sm:$0xff]
    %v1525 = vld [vmem:[#allocation7 + $0xe0] sm:$0xff]
    %v1526 = vld [vmem:[#allocation7 + $0xe8] sm:$0xff]
    %v1527 = vld [vmem:[#allocation7 + $0xf0] sm:$0xff]
    %v1528 = vld [vmem:[#allocation7 + $0xf8] sm:$0xff]
    %v1529 = vld [vmem:[#allocation7 + $0x100] sm:$0xff]
    %v1530 = vld [vmem:[#allocation7 + $0x108] sm:$0xff]
    %v1531 = vld [vmem:[#allocation7 + $0x110] sm:$0xff]
    %v1532 = vld [vmem:[#allocation7 + $0x118] sm:$0xff]
    %v1533 = vld [vmem:[#allocation7 + $0x120] sm:$0xff]
    %v1534 = vld [vmem:[#allocation7 + $0x128] sm:$0xff]
    %v1535 = vld [vmem:[#allocation7 + $0x130] sm:$0xff]
    %v1536 = vld [vmem:[#allocation7 + $0x138] sm:$0xff]
    %v1537 = vld [vmem:[#allocation7 + $0x140] sm:$0xff]
    %v1538 = vld [vmem:[#allocation7 + $0x148] sm:$0xff]
    %v1539 = vld [vmem:[#allocation7 + $0x150] sm:$0xff]
    %v1540 = vld [vmem:[#allocation7 + $0x158] sm:$0xff]
    %v1541 = vld [vmem:[#allocation7 + $0x160] sm:$0xff]
    %v1542 = vld [vmem:[#allocation7 + $0x168] sm:$0xff]
    %v1543 = vld [vmem:[#allocation7 + $0x170] sm:$0xff]
    %v1544 = vld [vmem:[#allocation7 + $0x178] sm:$0xff]
    %v1545 = vld [vmem:[#allocation7 + $0x180] sm:$0xff]
    %v1546 = vld [vmem:[#allocation7 + $0x188] sm:$0xff]
    %v1547 = vld [vmem:[#allocation7 + $0x190] sm:$0xff]
    %v1548 = vld [vmem:[#allocation7 + $0x198] sm:$0xff]
    %v1549 = vld [vmem:[#allocation7 + $0x1a0] sm:$0xff]
    %v1550 = vld [vmem:[#allocation7 + $0x1a8] sm:$0xff]
    %v1551 = vld [vmem:[#allocation7 + $0x1b0] sm:$0xff]
    %v1552 = vld [vmem:[#allocation7 + $0x1b8] sm:$0xff]
    %v1553 = vld [vmem:[#allocation7 + $0x1c0] sm:$0xff]
    %v1554 = vld [vmem:[#allocation7 + $0x1c8] sm:$0xff]
    %v1555 = vld [vmem:[#allocation7 + $0x1d0] sm:$0xff]
    %v1556 = vld [vmem:[#allocation7 + $0x1d8] sm:$0xff]
    %v1557 = vld [vmem:[#allocation7 + $0x1e0] sm:$0xff]
    %v1558 = vld [vmem:[#allocation7 + $0x1e8] sm:$0xff]
    %v1559 = vld [vmem:[#allocation7 + $0x1f0] sm:$0xff]
    %v1560 = vld [vmem:[#allocation7 + $0x1f8] sm:$0xff]
    %v1561 = vld [vmem:[#allocation7 + $0x200] sm:$0xff]
    %v1562 = vld [vmem:[#allocation7 + $0x208] sm:$0xff]
    %v1563 = vld [vmem:[#allocation7 + $0x210] sm:$0xff]
    %v1564 = vld [vmem:[#allocation7 + $0x218] sm:$0xff]
    %v1565 = vld [vmem:[#allocation7 + $0x220] sm:$0xff]
    %v1566 = vld [vmem:[#allocation7 + $0x228] sm:$0xff]
    %v1567 = vld [vmem:[#allocation7 + $0x230] sm:$0xff]
    %v1568 = vld [vmem:[#allocation7 + $0x238] sm:$0xff]
    %v1569 = vld [vmem:[#allocation7 + $0x240] sm:$0xff]
    %v1570 = vld [vmem:[#allocation7 + $0x248] sm:$0xff]
    %v1571 = vld [vmem:[#allocation7 + $0x250] sm:$0xff]
    %v1572 = vld [vmem:[#allocation7 + $0x258] sm:$0xff]
    %v1573 = vld [vmem:[#allocation7 + $0x260] sm:$0xff]
    %v1574 = vld [vmem:[#allocation7 + $0x268] sm:$0xff]
    %v1575 = vld [vmem:[#allocation7 + $0x270] sm:$0xff]
    %v1576 = vld [vmem:[#allocation7 + $0x278] sm:$0xff]
    %v1577 = vld [vmem:[#allocation7 + $0x280] sm:$0xff]
    %v1578 = vld [vmem:[#allocation7 + $0x288] sm:$0xff]
    %v1579 = vld [vmem:[#allocation7 + $0x290] sm:$0xff]
    %v1580 = vld [vmem:[#allocation7 + $0x298] sm:$0xff]
    %v1581 = vld [vmem:[#allocation7 + $0x2a0] sm:$0xff]
    %v1582 = vld [vmem:[#allocation7 + $0x2a8] sm:$0xff]
    %v1583 = vld [vmem:[#allocation7 + $0x2b0] sm:$0xff]
    %v1584 = vld [vmem:[#allocation7 + $0x2b8] sm:$0xff]
    %v1585 = vld [vmem:[#allocation7 + $0x2c0] sm:$0xff]
    %v1586 = vld [vmem:[#allocation7 + $0x2c8] sm:$0xff]
    %v1587 = vld [vmem:[#allocation7 + $0x2d0] sm:$0xff]
    %v1588 = vld [vmem:[#allocation7 + $0x2d8] sm:$0xff]
    %v1589 = vld [vmem:[#allocation7 + $0x2e0] sm:$0xff]
    %v1590 = vld [vmem:[#allocation7 + $0x2e8] sm:$0xff]
    %v1591 = vld [vmem:[#allocation7 + $0x2f0] sm:$0xff]
    %v1592 = vld [vmem:[#allocation7 + $0x2f8] sm:$0xff]
    %v1593 = vld [vmem:[#allocation7 + $0x300] sm:$0xff]
    %v1594 = vld [vmem:[#allocation7 + $0x308] sm:$0xff]
    %v1595 = vld [vmem:[#allocation7 + $0x310] sm:$0xff]
    %v1596 = vld [vmem:[#allocation7 + $0x318] sm:$0xff]
    %v1597 = vld [vmem:[#allocation7 + $0x320] sm:$0xff]
    %v1598 = vld [vmem:[#allocation7 + $0x328] sm:$0xff]
    %v1599 = vld [vmem:[#allocation7 + $0x330] sm:$0xff]
    %v1600 = vld [vmem:[#allocation7 + $0x338] sm:$0xff]
    %v1601 = vld [vmem:[#allocation7 + $0x340] sm:$0xff]
    %v1602 = vld [vmem:[#allocation7 + $0x348] sm:$0xff]
    %v1603 = vld [vmem:[#allocation7 + $0x350] sm:$0xff]
    %v1604 = vld [vmem:[#allocation7 + $0x358] sm:$0xff]
    %v1605 = vld [vmem:[#allocation7 + $0x360] sm:$0xff]
    %v1606 = vld [vmem:[#allocation7 + $0x368] sm:$0xff]
    %v1607 = vld [vmem:[#allocation7 + $0x370] sm:$0xff]
    %v1608 = vld [vmem:[#allocation7 + $0x378] sm:$0xff]
    %v1609 = vld [vmem:[#allocation7 + $0x380] sm:$0xff]
    %v1610 = vld [vmem:[#allocation7 + $0x388] sm:$0xff]
    %v1611 = vld [vmem:[#allocation7 + $0x390] sm:$0xff]
    %v1612 = vld [vmem:[#allocation7 + $0x398] sm:$0xff]
    %v1613 = vld [vmem:[#allocation7 + $0x3a0] sm:$0xff]
    %v1614 = vld [vmem:[#allocation7 + $0x3a8] sm:$0xff]
    %v1615 = vld [vmem:[#allocation7 + $0x3b0] sm:$0xff]
    %v1616 = vld [vmem:[#allocation7 + $0x3b8] sm:$0xff]
    %v1617 = vld [vmem:[#allocation7 + $0x3c0] sm:$0xff]
    %v1618 = vld [vmem:[#allocation7 + $0x3c8] sm:$0xff]
    %v1619 = vld [vmem:[#allocation7 + $0x3d0] sm:$0xff]
    %v1620 = vld [vmem:[#allocation7 + $0x3d8] sm:$0xff]
    %v1621 = vld [vmem:[#allocation7 + $0x3e0] sm:$0xff]
    %v1622 = vld [vmem:[#allocation7 + $0x3e8] sm:$0xff]
    %v1623 = vld [vmem:[#allocation7 + $0x3f0] sm:$0xff]
    %v1624 = vld [vmem:[#allocation7 + $0x3f8] sm:$0xff]
    %v1753 = vunpack.c.l.b16 %v1369
    %v1754 = vunpack.c.h.b16 %v1369
    %v1755 = vunpack.c.l.b16 %v1370
    %v1756 = vunpack.c.h.b16 %v1370
    %v1757 = vunpack.c.l.b16 %v1371
    %v1758 = vunpack.c.h.b16 %v1371
    %v1759 = vunpack.c.l.b16 %v1372
    %v1760 = vunpack.c.h.b16 %v1372
    %v1761 = vunpack.c.l.b16 %v1373
    %v1762 = vunpack.c.h.b16 %v1373
    %v1763 = vunpack.c.l.b16 %v1374
    %v1764 = vunpack.c.h.b16 %v1374
    %v1765 = vunpack.c.l.b16 %v1375
    %v1766 = vunpack.c.h.b16 %v1375
    %v1767 = vunpack.c.l.b16 %v1376
    %v1768 = vunpack.c.h.b16 %v1376
    %v1769 = vunpack.c.l.b16 %v1377
    %v1770 = vunpack.c.h.b16 %v1377
    %v1771 = vunpack.c.l.b16 %v1378
    %v1772 = vunpack.c.h.b16 %v1378
    %v1773 = vunpack.c.l.b16 %v1379
    %v1774 = vunpack.c.h.b16 %v1379
    %v1775 = vunpack.c.l.b16 %v1380
    %v1776 = vunpack.c.h.b16 %v1380
    %v1777 = vunpack.c.l.b16 %v1381
    %v1778 = vunpack.c.h.b16 %v1381
    %v1779 = vunpack.c.l.b16 %v1382
    %v1780 = vunpack.c.h.b16 %v1382
    %v1781 = vunpack.c.l.b16 %v1383
    %v1782 = vunpack.c.h.b16 %v1383
    %v1783 = vunpack.c.l.b16 %v1384
    %v1784 = vunpack.c.h.b16 %v1384
    %v1785 = vunpack.c.l.b16 %v1385
    %v1786 = vunpack.c.h.b16 %v1385
    %v1787 = vunpack.c.l.b16 %v1386
    %v1788 = vunpack.c.h.b16 %v1386
    %v1789 = vunpack.c.l.b16 %v1387
    %v1790 = vunpack.c.h.b16 %v1387
    %v1791 = vunpack.c.l.b16 %v1388
    %v1792 = vunpack.c.h.b16 %v1388
    %v1793 = vunpack.c.l.b16 %v1389
    %v1794 = vunpack.c.h.b16 %v1389
    %v1795 = vunpack.c.l.b16 %v1390
    %v1796 = vunpack.c.h.b16 %v1390
    %v1797 = vunpack.c.l.b16 %v1391
    %v1798 = vunpack.c.h.b16 %v1391
    %v1799 = vunpack.c.l.b16 %v1392
    %v1800 = vunpack.c.h.b16 %v1392
    %v1801 = vunpack.c.l.b16 %v1393
    %v1802 = vunpack.c.h.b16 %v1393
    %v1803 = vunpack.c.l.b16 %v1394
    %v1804 = vunpack.c.h.b16 %v1394
    %v1805 = vunpack.c.l.b16 %v1395
    %v1806 = vunpack.c.h.b16 %v1395
    %v1807 = vunpack.c.l.b16 %v1396
    %v1808 = vunpack.c.h.b16 %v1396
    %v1809 = vunpack.c.l.b16 %v1397
    %v1810 = vunpack.c.h.b16 %v1397
    %v1811 = vunpack.c.l.b16 %v1398
    %v1812 = vunpack.c.h.b16 %v1398
    %v1813 = vunpack.c.l.b16 %v1399
    %v1814 = vunpack.c.h.b16 %v1399
    %v1815 = vunpack.c.l.b16 %v1400
    %v1816 = vunpack.c.h.b16 %v1400
    %v1817 = vunpack.c.l.b16 %v1401
    %v1818 = vunpack.c.h.b16 %v1401
    %v1819 = vunpack.c.l.b16 %v1402
    %v1820 = vunpack.c.h.b16 %v1402
    %v1821 = vunpack.c.l.b16 %v1403
    %v1822 = vunpack.c.h.b16 %v1403
    %v1823 = vunpack.c.l.b16 %v1404
    %v1824 = vunpack.c.h.b16 %v1404
    %v1825 = vunpack.c.l.b16 %v1405
    %v1826 = vunpack.c.h.b16 %v1405
    %v1827 = vunpack.c.l.b16 %v1406
    %v1828 = vunpack.c.h.b16 %v1406
    %v1829 = vunpack.c.l.b16 %v1407
    %v1830 = vunpack.c.h.b16 %v1407
    %v1831 = vunpack.c.l.b16 %v1408
    %v1832 = vunpack.c.h.b16 %v1408
    %v1833 = vunpack.c.l.b16 %v1409
    %v1834 = vunpack.c.h.b16 %v1409
    %v1835 = vunpack.c.l.b16 %v1410
    %v1836 = vunpack.c.h.b16 %v1410
    %v1837 = vunpack.c.l.b16 %v1411
    %v1838 = vunpack.c.h.b16 %v1411
    %v1839 = vunpack.c.l.b16 %v1412
    %v1840 = vunpack.c.h.b16 %v1412
    %v1841 = vunpack.c.l.b16 %v1413
    %v1842 = vunpack.c.h.b16 %v1413
    %v1843 = vunpack.c.l.b16 %v1414
    %v1844 = vunpack.c.h.b16 %v1414
    %v1845 = vunpack.c.l.b16 %v1415
    %v1846 = vunpack.c.h.b16 %v1415
    %v1847 = vunpack.c.l.b16 %v1416
    %v1848 = vunpack.c.h.b16 %v1416
    %v1849 = vunpack.c.l.b16 %v1417
    %v1850 = vunpack.c.h.b16 %v1417
    %v1851 = vunpack.c.l.b16 %v1418
    %v1852 = vunpack.c.h.b16 %v1418
    %v1853 = vunpack.c.l.b16 %v1419
    %v1854 = vunpack.c.h.b16 %v1419
    %v1855 = vunpack.c.l.b16 %v1420
    %v1856 = vunpack.c.h.b16 %v1420
    %v1857 = vunpack.c.l.b16 %v1421
    %v1858 = vunpack.c.h.b16 %v1421
    %v1859 = vunpack.c.l.b16 %v1422
    %v1860 = vunpack.c.h.b16 %v1422
    %v1861 = vunpack.c.l.b16 %v1423
    %v1862 = vunpack.c.h.b16 %v1423
    %v1863 = vunpack.c.l.b16 %v1424
    %v1864 = vunpack.c.h.b16 %v1424
    %v1865 = vunpack.c.l.b16 %v1425
    %v1866 = vunpack.c.h.b16 %v1425
    %v1867 = vunpack.c.l.b16 %v1426
    %v1868 = vunpack.c.h.b16 %v1426
    %v1869 = vunpack.c.l.b16 %v1427
    %v1870 = vunpack.c.h.b16 %v1427
    %v1871 = vunpack.c.l.b16 %v1428
    %v1872 = vunpack.c.h.b16 %v1428
    %v1873 = vunpack.c.l.b16 %v1429
    %v1874 = vunpack.c.h.b16 %v1429
    %v1875 = vunpack.c.l.b16 %v1430
    %v1876 = vunpack.c.h.b16 %v1430
    %v1877 = vunpack.c.l.b16 %v1431
    %v1878 = vunpack.c.h.b16 %v1431
    %v1879 = vunpack.c.l.b16 %v1432
    %v1880 = vunpack.c.h.b16 %v1432
    %v1881 = vunpack.c.l.b16 %v1433
    %v1882 = vunpack.c.h.b16 %v1433
    %v1883 = vunpack.c.l.b16 %v1434
    %v1884 = vunpack.c.h.b16 %v1434
    %v1885 = vunpack.c.l.b16 %v1435
    %v1886 = vunpack.c.h.b16 %v1435
    %v1887 = vunpack.c.l.b16 %v1436
    %v1888 = vunpack.c.h.b16 %v1436
    %v1889 = vunpack.c.l.b16 %v1437
    %v1890 = vunpack.c.h.b16 %v1437
    %v1891 = vunpack.c.l.b16 %v1438
    %v1892 = vunpack.c.h.b16 %v1438
    %v1893 = vunpack.c.l.b16 %v1439
    %v1894 = vunpack.c.h.b16 %v1439
    %v1895 = vunpack.c.l.b16 %v1440
    %v1896 = vunpack.c.h.b16 %v1440
    %v1897 = vunpack.c.l.b16 %v1441
    %v1898 = vunpack.c.h.b16 %v1441
    %v1899 = vunpack.c.l.b16 %v1442
    %v1900 = vunpack.c.h.b16 %v1442
    %v1901 = vunpack.c.l.b16 %v1443
    %v1902 = vunpack.c.h.b16 %v1443
    %v1903 = vunpack.c.l.b16 %v1444
    %v1904 = vunpack.c.h.b16 %v1444
    %v1905 = vunpack.c.l.b16 %v1445
    %v1906 = vunpack.c.h.b16 %v1445
    %v1907 = vunpack.c.l.b16 %v1446
    %v1908 = vunpack.c.h.b16 %v1446
    %v1909 = vunpack.c.l.b16 %v1447
    %v1910 = vunpack.c.h.b16 %v1447
    %v1911 = vunpack.c.l.b16 %v1448
    %v1912 = vunpack.c.h.b16 %v1448
    %v1913 = vunpack.c.l.b16 %v1449
    %v1914 = vunpack.c.h.b16 %v1449
    %v1915 = vunpack.c.l.b16 %v1450
    %v1916 = vunpack.c.h.b16 %v1450
    %v1917 = vunpack.c.l.b16 %v1451
    %v1918 = vunpack.c.h.b16 %v1451
    %v1919 = vunpack.c.l.b16 %v1452
    %v1920 = vunpack.c.h.b16 %v1452
    %v1921 = vunpack.c.l.b16 %v1453
    %v1922 = vunpack.c.h.b16 %v1453
    %v1923 = vunpack.c.l.b16 %v1454
    %v1924 = vunpack.c.h.b16 %v1454
    %v1925 = vunpack.c.l.b16 %v1455
    %v1926 = vunpack.c.h.b16 %v1455
    %v1927 = vunpack.c.l.b16 %v1456
    %v1928 = vunpack.c.h.b16 %v1456
    %v1929 = vunpack.c.l.b16 %v1457
    %v1930 = vunpack.c.h.b16 %v1457
    %v1931 = vunpack.c.l.b16 %v1458
    %v1932 = vunpack.c.h.b16 %v1458
    %v1933 = vunpack.c.l.b16 %v1459
    %v1934 = vunpack.c.h.b16 %v1459
    %v1935 = vunpack.c.l.b16 %v1460
    %v1936 = vunpack.c.h.b16 %v1460
    %v1937 = vunpack.c.l.b16 %v1461
    %v1938 = vunpack.c.h.b16 %v1461
    %v1939 = vunpack.c.l.b16 %v1462
    %v1940 = vunpack.c.h.b16 %v1462
    %v1941 = vunpack.c.l.b16 %v1463
    %v1942 = vunpack.c.h.b16 %v1463
    %v1943 = vunpack.c.l.b16 %v1464
    %v1944 = vunpack.c.h.b16 %v1464
    %v1945 = vunpack.c.l.b16 %v1465
    %v1946 = vunpack.c.h.b16 %v1465
    %v1947 = vunpack.c.l.b16 %v1466
    %v1948 = vunpack.c.h.b16 %v1466
    %v1949 = vunpack.c.l.b16 %v1467
    %v1950 = vunpack.c.h.b16 %v1467
    %v1951 = vunpack.c.l.b16 %v1468
    %v1952 = vunpack.c.h.b16 %v1468
    %v1953 = vunpack.c.l.b16 %v1469
    %v1954 = vunpack.c.h.b16 %v1469
    %v1955 = vunpack.c.l.b16 %v1470
    %v1956 = vunpack.c.h.b16 %v1470
    %v1957 = vunpack.c.l.b16 %v1471
    %v1958 = vunpack.c.h.b16 %v1471
    %v1959 = vunpack.c.l.b16 %v1472
    %v1960 = vunpack.c.h.b16 %v1472
    %v1961 = vunpack.c.l.b16 %v1473
    %v1962 = vunpack.c.h.b16 %v1473
    %v1963 = vunpack.c.l.b16 %v1474
    %v1964 = vunpack.c.h.b16 %v1474
    %v1965 = vunpack.c.l.b16 %v1475
    %v1966 = vunpack.c.h.b16 %v1475
    %v1967 = vunpack.c.l.b16 %v1476
    %v1968 = vunpack.c.h.b16 %v1476
    %v1969 = vunpack.c.l.b16 %v1477
    %v1970 = vunpack.c.h.b16 %v1477
    %v1971 = vunpack.c.l.b16 %v1478
    %v1972 = vunpack.c.h.b16 %v1478
    %v1973 = vunpack.c.l.b16 %v1479
    %v1974 = vunpack.c.h.b16 %v1479
    %v1975 = vunpack.c.l.b16 %v1480
    %v1976 = vunpack.c.h.b16 %v1480
    %v1977 = vunpack.c.l.b16 %v1481
    %v1978 = vunpack.c.h.b16 %v1481
    %v1979 = vunpack.c.l.b16 %v1482
    %v1980 = vunpack.c.h.b16 %v1482
    %v1981 = vunpack.c.l.b16 %v1483
    %v1982 = vunpack.c.h.b16 %v1483
    %v1983 = vunpack.c.l.b16 %v1484
    %v1984 = vunpack.c.h.b16 %v1484
    %v1985 = vunpack.c.l.b16 %v1485
    %v1986 = vunpack.c.h.b16 %v1485
    %v1987 = vunpack.c.l.b16 %v1486
    %v1988 = vunpack.c.h.b16 %v1486
    %v1989 = vunpack.c.l.b16 %v1487
    %v1990 = vunpack.c.h.b16 %v1487
    %v1991 = vunpack.c.l.b16 %v1488
    %v1992 = vunpack.c.h.b16 %v1488
    %v1993 = vunpack.c.l.b16 %v1489
    %v1994 = vunpack.c.h.b16 %v1489
    %v1995 = vunpack.c.l.b16 %v1490
    %v1996 = vunpack.c.h.b16 %v1490
    %v1997 = vunpack.c.l.b16 %v1491
    %v1998 = vunpack.c.h.b16 %v1491
    %v1999 = vunpack.c.l.b16 %v1492
    %v2000 = vunpack.c.h.b16 %v1492
    %v2001 = vunpack.c.l.b16 %v1493
    %v2002 = vunpack.c.h.b16 %v1493
    %v2003 = vunpack.c.l.b16 %v1494
    %v2004 = vunpack.c.h.b16 %v1494
    %v2005 = vunpack.c.l.b16 %v1495
    %v2006 = vunpack.c.h.b16 %v1495
    %v2007 = vunpack.c.l.b16 %v1496
    %v2008 = vunpack.c.h.b16 %v1496
    %v2009 = vpack.c.b16 %v1757, %v1753
    %v2010 = vpack.c.b16 %v1758, %v1754
    %v2011 = vpack.c.b16 %v1759, %v1755
    %v2012 = vpack.c.b16 %v1760, %v1756
    %v2013 = vpack.c.b16 %v1765, %v1761
    %v2014 = vpack.c.b16 %v1766, %v1762
    %v2015 = vpack.c.b16 %v1767, %v1763
    %v2016 = vpack.c.b16 %v1768, %v1764
    %v2017 = vpack.c.b16 %v1773, %v1769
    %v2018 = vpack.c.b16 %v1774, %v1770
    %v2019 = vpack.c.b16 %v1775, %v1771
    %v2020 = vpack.c.b16 %v1776, %v1772
    %v2021 = vpack.c.b16 %v1781, %v1777
    %v2022 = vpack.c.b16 %v1782, %v1778
    %v2023 = vpack.c.b16 %v1783, %v1779
    %v2024 = vpack.c.b16 %v1784, %v1780
    %v2025 = vpack.c.b16 %v1789, %v1785
    %v2026 = vpack.c.b16 %v1790, %v1786
    %v2027 = vpack.c.b16 %v1791, %v1787
    %v2028 = vpack.c.b16 %v1792, %v1788
    %v2029 = vpack.c.b16 %v1797, %v1793
    %v2030 = vpack.c.b16 %v1798, %v1794
    %v2031 = vpack.c.b16 %v1799, %v1795
    %v2032 = vpack.c.b16 %v1800, %v1796
    %v2033 = vpack.c.b16 %v1805, %v1801
    %v2034 = vpack.c.b16 %v1806, %v1802
    %v2035 = vpack.c.b16 %v1807, %v1803
    %v2036 = vpack.c.b16 %v1808, %v1804
    %v2037 = vpack.c.b16 %v1813, %v1809
    %v2038 = vpack.c.b16 %v1814, %v1810
    %v2039 = vpack.c.b16 %v1815, %v1811
    %v2040 = vpack.c.b16 %v1816, %v1812
    %v2041 = vpack.c.b16 %v1821, %v1817
    %v2042 = vpack.c.b16 %v1822, %v1818
    %v2043 = vpack.c.b16 %v1823, %v1819
    %v2044 = vpack.c.b16 %v1824, %v1820
    %v2045 = vpack.c.b16 %v1829, %v1825
    %v2046 = vpack.c.b16 %v1830, %v1826
    %v2047 = vpack.c.b16 %v1831, %v1827
    %v2048 = vpack.c.b16 %v1832, %v1828
    %v2049 = vpack.c.b16 %v1837, %v1833
    %v2050 = vpack.c.b16 %v1838, %v1834
    %v2051 = vpack.c.b16 %v1839, %v1835
    %v2052 = vpack.c.b16 %v1840, %v1836
    %v2053 = vpack.c.b16 %v1845, %v1841
    %v2054 = vpack.c.b16 %v1846, %v1842
    %v2055 = vpack.c.b16 %v1847, %v1843
    %v2056 = vpack.c.b16 %v1848, %v1844
    %v2057 = vpack.c.b16 %v1853, %v1849
    %v2058 = vpack.c.b16 %v1854, %v1850
    %v2059 = vpack.c.b16 %v1855, %v1851
    %v2060 = vpack.c.b16 %v1856, %v1852
    %v2061 = vpack.c.b16 %v1861, %v1857
    %v2062 = vpack.c.b16 %v1862, %v1858
    %v2063 = vpack.c.b16 %v1863, %v1859
    %v2064 = vpack.c.b16 %v1864, %v1860
    %v2065 = vpack.c.b16 %v1869, %v1865
    %v2066 = vpack.c.b16 %v1870, %v1866
    %v2067 = vpack.c.b16 %v1871, %v1867
    %v2068 = vpack.c.b16 %v1872, %v1868
    %v2069 = vpack.c.b16 %v1877, %v1873
    %v2070 = vpack.c.b16 %v1878, %v1874
    %v2071 = vpack.c.b16 %v1879, %v1875
    %v2072 = vpack.c.b16 %v1880, %v1876
    %v2073 = vpack.c.b16 %v1885, %v1881
    %v2074 = vpack.c.b16 %v1886, %v1882
    %v2075 = vpack.c.b16 %v1887, %v1883
    %v2076 = vpack.c.b16 %v1888, %v1884
    %v2077 = vpack.c.b16 %v1893, %v1889
    %v2078 = vpack.c.b16 %v1894, %v1890
    %v2079 = vpack.c.b16 %v1895, %v1891
    %v2080 = vpack.c.b16 %v1896, %v1892
    %v2081 = vpack.c.b16 %v1901, %v1897
    %v2082 = vpack.c.b16 %v1902, %v1898
    %v2083 = vpack.c.b16 %v1903, %v1899
    %v2084 = vpack.c.b16 %v1904, %v1900
    %v2085 = vpack.c.b16 %v1909, %v1905
    %v2086 = vpack.c.b16 %v1910, %v1906
    %v2087 = vpack.c.b16 %v1911, %v1907
    %v2088 = vpack.c.b16 %v1912, %v1908
    %v2089 = vpack.c.b16 %v1917, %v1913
    %v2090 = vpack.c.b16 %v1918, %v1914
    %v2091 = vpack.c.b16 %v1919, %v1915
    %v2092 = vpack.c.b16 %v1920, %v1916
    %v2093 = vpack.c.b16 %v1925, %v1921
    %v2094 = vpack.c.b16 %v1926, %v1922
    %v2095 = vpack.c.b16 %v1927, %v1923
    %v2096 = vpack.c.b16 %v1928, %v1924
    %v2097 = vpack.c.b16 %v1933, %v1929
    %v2098 = vpack.c.b16 %v1934, %v1930
    %v2099 = vpack.c.b16 %v1935, %v1931
    %v2100 = vpack.c.b16 %v1936, %v1932
    %v2101 = vpack.c.b16 %v1941, %v1937
    %v2102 = vpack.c.b16 %v1942, %v1938
    %v2103 = vpack.c.b16 %v1943, %v1939
    %v2104 = vpack.c.b16 %v1944, %v1940
    %v2105 = vpack.c.b16 %v1949, %v1945
    %v2106 = vpack.c.b16 %v1950, %v1946
    %v2107 = vpack.c.b16 %v1951, %v1947
    %v2108 = vpack.c.b16 %v1952, %v1948
    %v2109 = vpack.c.b16 %v1957, %v1953
    %v2110 = vpack.c.b16 %v1958, %v1954
    %v2111 = vpack.c.b16 %v1959, %v1955
    %v2112 = vpack.c.b16 %v1960, %v1956
    %v2113 = vpack.c.b16 %v1965, %v1961
    %v2114 = vpack.c.b16 %v1966, %v1962
    %v2115 = vpack.c.b16 %v1967, %v1963
    %v2116 = vpack.c.b16 %v1968, %v1964
    %v2117 = vpack.c.b16 %v1973, %v1969
    %v2118 = vpack.c.b16 %v1974, %v1970
    %v2119 = vpack.c.b16 %v1975, %v1971
    %v2120 = vpack.c.b16 %v1976, %v1972
    %v2121 = vpack.c.b16 %v1981, %v1977
    %v2122 = vpack.c.b16 %v1982, %v1978
    %v2123 = vpack.c.b16 %v1983, %v1979
    %v2124 = vpack.c.b16 %v1984, %v1980
    %v2125 = vpack.c.b16 %v1989, %v1985
    %v2126 = vpack.c.b16 %v1990, %v1986
    %v2127 = vpack.c.b16 %v1991, %v1987
    %v2128 = vpack.c.b16 %v1992, %v1988
    %v2129 = vpack.c.b16 %v1997, %v1993
    %v2130 = vpack.c.b16 %v1998, %v1994
    %v2131 = vpack.c.b16 %v1999, %v1995
    %v2132 = vpack.c.b16 %v2000, %v1996
    %v2133 = vpack.c.b16 %v2005, %v2001
    %v2134 = vpack.c.b16 %v2006, %v2002
    %v2135 = vpack.c.b16 %v2007, %v2003
    %v2136 = vpack.c.b16 %v2008, %v2004
    %2265 = vmatprep.subr.bf16.mxu0 %v2010
    %2266 = vmatpush1.bf16.msra.mxu0 %v2009
    %2267 = vmatprep.subr.bf16.mxu0 %v2014
    %2268 = vmatpush1.bf16.msra.mxu0 %v2013
    %2269 = vmatprep.subr.bf16.mxu0 %v2018
    %2270 = vmatpush1.bf16.msra.mxu0 %v2017
    %2271 = vmatprep.subr.bf16.mxu0 %v2022
    %2272 = vmatpush1.bf16.msra.mxu0 %v2021
    %2273 = vmatprep.subr.bf16.mxu0 %v2026
    %2274 = vmatpush1.bf16.msra.mxu0 %v2025
    %2275 = vmatprep.subr.bf16.mxu0 %v2030
    %2276 = vmatpush1.bf16.msra.mxu0 %v2029
    %2277 = vmatprep.subr.bf16.mxu0 %v2034
    %2278 = vmatpush1.bf16.msra.mxu0 %v2033
    %2279 = vmatprep.subr.bf16.mxu0 %v2038
    %2280 = vmatpush1.bf16.msra.mxu0 %v2037
    %2281 = vmatprep.subr.bf16.mxu0 %v2042
    %2282 = vmatpush1.bf16.msra.mxu0 %v2041
    %2283 = vmatprep.subr.bf16.mxu0 %v2046
    %2284 = vmatpush1.bf16.msra.mxu0 %v2045
    %2285 = vmatprep.subr.bf16.mxu0 %v2050
    %2286 = vmatpush1.bf16.msra.mxu0 %v2049
    %2287 = vmatprep.subr.bf16.mxu0 %v2054
    %2288 = vmatpush1.bf16.msra.mxu0 %v2053
    %2289 = vmatprep.subr.bf16.mxu0 %v2058
    %2290 = vmatpush1.bf16.msra.mxu0 %v2057
    %2291 = vmatprep.subr.bf16.mxu0 %v2062
    %2292 = vmatpush1.bf16.msra.mxu0 %v2061
    %2293 = vmatprep.subr.bf16.mxu0 %v2066
    %2294 = vmatpush1.bf16.msra.mxu0 %v2065
    %2295 = vmatprep.subr.bf16.mxu0 %v2070
    %2296 = vmatpush1.bf16.msra.mxu0 %v2069
    %2297 = vmatprep.mubr.bf16.mxu0 %v112
    %2298 = vmatmul.mubr.bf16.gmra.mrb[0].mxu0 %v104
    %v2299 = vpop.f32.mrb[0].mxu0
    %v2300 = vadd.f32 0.0, %v2299
    %v2301 = vpop.f32.mrb[0].mxu0
    %v2302 = vadd.f32 0.0, %v2301
    %v2303 = vpop.f32.mrb[0].mxu0
    %v2304 = vpop.f32.mrb[0].mxu0
    %2305 = vdwg.mxu0
    %2306 = vmatprep.subr.bf16.mxu0 %v2074
    %2307 = vmatpush1.bf16.msra.mxu0 %v2073
    %2308 = vmatprep.subr.bf16.mxu0 %v2078
    %2309 = vmatpush1.bf16.msra.mxu0 %v2077
    %2310 = vmatprep.subr.bf16.mxu0 %v2082
    %2311 = vmatpush1.bf16.msra.mxu0 %v2081
    %2312 = vmatprep.subr.bf16.mxu0 %v2086
    %2313 = vmatpush1.bf16.msra.mxu0 %v2085
    %2314 = vmatprep.subr.bf16.mxu0 %v2090
    %2315 = vmatpush1.bf16.msra.mxu0 %v2089
    %2316 = vmatprep.subr.bf16.mxu0 %v2094
    %2317 = vmatpush1.bf16.msra.mxu0 %v2093
    %2318 = vmatprep.subr.bf16.mxu0 %v2098
    %2319 = vmatpush1.bf16.msra.mxu0 %v2097
    %2320 = vmatprep.subr.bf16.mxu0 %v2102
    %2321 = vmatpush1.bf16.msra.mxu0 %v2101
    %2322 = vmatprep.subr.bf16.mxu0 %v2106
    %2323 = vmatpush1.bf16.msra.mxu0 %v2105
    %2324 = vmatprep.subr.bf16.mxu0 %v2110
    %2325 = vmatpush1.bf16.msra.mxu0 %v2109
    %2326 = vmatprep.subr.bf16.mxu0 %v2114
    %2327 = vmatpush1.bf16.msra.mxu0 %v2113
    %2328 = vmatprep.subr.bf16.mxu0 %v2118
    %2329 = vmatpush1.bf16.msra.mxu0 %v2117
    %2330 = vmatprep.subr.bf16.mxu0 %v2122
    %2331 = vmatpush1.bf16.msra.mxu0 %v2121
    %2332 = vmatprep.subr.bf16.mxu0 %v2126
    %2333 = vmatpush1.bf16.msra.mxu0 %v2125
    %2334 = vmatprep.subr.bf16.mxu0 %v2130
    %2335 = vmatpush1.bf16.msra.mxu0 %v2129
    %2336 = vmatprep.subr.bf16.mxu0 %v2134
    %2337 = vmatpush1.bf16.msra.mxu0 %v2133
    %2338 = vmatprep.mubr.bf16.mxu0 %v113
    %2339 = vmatmul.mubr.bf16.gmra.mrb[0].mxu0 %v111
    %v2340 = vpop.f32.mrb[0].mxu0
    %v2341 = vadd.f32 %v2300, %v2340
    %v2342 = vpop.f32.mrb[0].mxu0
    %v2343 = vadd.f32 %v2302, %v2342
    %v2344 = vpop.f32.mrb[0].mxu0
    %v2345 = vpop.f32.mrb[0].mxu0
    %2346 = vdwg.mxu0
    %2347 = vmatprep.subr.bf16.mxu0 %v2012
    %2348 = vmatpush1.bf16.msra.mxu0 %v2011
    %2349 = vmatprep.subr.bf16.mxu0 %v2016
    %2350 = vmatpush1.bf16.msra.mxu0 %v2015
    %2351 = vmatprep.subr.bf16.mxu0 %v2020
    %2352 = vmatpush1.bf16.msra.mxu0 %v2019
    %2353 = vmatprep.subr.bf16.mxu0 %v2024
    %2354 = vmatpush1.bf16.msra.mxu0 %v2023
    %2355 = vmatprep.subr.bf16.mxu0 %v2028
    %2356 = vmatpush1.bf16.msra.mxu0 %v2027
    %2357 = vmatprep.subr.bf16.mxu0 %v2032
    %2358 = vmatpush1.bf16.msra.mxu0 %v2031
    %2359 = vmatprep.subr.bf16.mxu0 %v2036
    %2360 = vmatpush1.bf16.msra.mxu0 %v2035
    %2361 = vmatprep.subr.bf16.mxu0 %v2040
    %2362 = vmatpush1.bf16.msra.mxu0 %v2039
    %2363 = vmatprep.subr.bf16.mxu0 %v2044
    %2364 = vmatpush1.bf16.msra.mxu0 %v2043
    %2365 = vmatprep.subr.bf16.mxu0 %v2048
    %2366 = vmatpush1.bf16.msra.mxu0 %v2047
    %2367 = vmatprep.subr.bf16.mxu0 %v2052
    %2368 = vmatpush1.bf16.msra.mxu0 %v2051
    %2369 = vmatprep.subr.bf16.mxu0 %v2056
    %2370 = vmatpush1.bf16.msra.mxu0 %v2055
    %2371 = vmatprep.subr.bf16.mxu0 %v2060
    %2372 = vmatpush1.bf16.msra.mxu0 %v2059
    %2373 = vmatprep.subr.bf16.mxu0 %v2064
    %2374 = vmatpush1.bf16.msra.mxu0 %v2063
    %2375 = vmatprep.subr.bf16.mxu0 %v2068
    %2376 = vmatpush1.bf16.msra.mxu0 %v2067
    %2377 = vmatprep.subr.bf16.mxu0 %v2072
    %2378 = vmatpush1.bf16.msra.mxu0 %v2071
    %2379 = vmatprep.mubr.bf16.mxu0 %v112
    %2380 = vmatmul.mubr.bf16.gmra.mrb[0].mxu0 %v104
    %v2381 = vpop.f32.mrb[0].mxu0
    %v2382 = vadd.f32 0.0, %v2381
    %v2383 = vpop.f32.mrb[0].mxu0
    %v2384 = vadd.f32 0.0, %v2383
    %v2385 = vpop.f32.mrb[0].mxu0
    %v2386 = vpop.f32.mrb[0].mxu0
    %2387 = vdwg.mxu0
    %2388 = vmatprep.subr.bf16.mxu0 %v2076
    %2389 = vmatpush1.bf16.msra.mxu0 %v2075
    %2390 = vmatprep.subr.bf16.mxu0 %v2080
    %2391 = vmatpush1.bf16.msra.mxu0 %v2079
    %2392 = vmatprep.subr.bf16.mxu0 %v2084
    %2393 = vmatpush1.bf16.msra.mxu0 %v2083
    %2394 = vmatprep.subr.bf16.mxu0 %v2088
    %2395 = vmatpush1.bf16.msra.mxu0 %v2087
    %2396 = vmatprep.subr.bf16.mxu0 %v2092
    %2397 = vmatpush1.bf16.msra.mxu0 %v2091
    %2398 = vmatprep.subr.bf16.mxu0 %v2096
    %2399 = vmatpush1.bf16.msra.mxu0 %v2095
    %2400 = vmatprep.subr.bf16.mxu0 %v2100
    %2401 = vmatpush1.bf16.msra.mxu0 %v2099
    %2402 = vmatprep.subr.bf16.mxu0 %v2104
    %2403 = vmatpush1.bf16.msra.mxu0 %v2103
    %2404 = vmatprep.subr.bf16.mxu0 %v2108
    %2405 = vmatpush1.bf16.msra.mxu0 %v2107
    %2406 = vmatprep.subr.bf16.mxu0 %v2112
    %2407 = vmatpush1.bf16.msra.mxu0 %v2111
    %2408 = vmatprep.subr.bf16.mxu0 %v2116
    %2409 = vmatpush1.bf16.msra.mxu0 %v2115
    %2410 = vmatprep.subr.bf16.mxu0 %v2120
    %2411 = vmatpush1.bf16.msra.mxu0 %v2119
    %2412 = vmatprep.subr.bf16.mxu0 %v2124
    %2413 = vmatpush1.bf16.msra.mxu0 %v2123
    %2414 = vmatprep.subr.bf16.mxu0 %v2128
    %2415 = vmatpush1.bf16.msra.mxu0 %v2127
    %2416 = vmatprep.subr.bf16.mxu0 %v2132
    %2417 = vmatpush1.bf16.msra.mxu0 %v2131
    %2418 = vmatprep.subr.bf16.mxu0 %v2136
    %2419 = vmatpush1.bf16.msra.mxu0 %v2135
    %2420 = vmatprep.mubr.bf16.mxu0 %v113
    %2421 = vmatmul.mubr.bf16.gmra.mrb[0].mxu0 %v111
    %v2422 = vpop.f32.mrb[0].mxu0
    %v2423 = vadd.f32 %v2382, %v2422
    %v2424 = vpop.f32.mrb[0].mxu0
    %v2425 = vadd.f32 %v2384, %v2424
    %v2426 = vpop.f32.mrb[0].mxu0
    %v2427 = vpop.f32.mrb[0].mxu0
    %2428 = vdwg.mxu0
    %v2429 = vpack.c.bf16 %v2341, %v2341
    %v2430 = vpack.c.bf16 %v2343, %v2343
    %v2431 = vpack.c.bf16 %v2423, %v2423
    %v2432 = vpack.c.bf16 %v2425, %v2425
    %v2434 = vsel %vm118, %v2429, 0
    %v2437 = vsel %vm118, %v2430, 0
    %v2440 = vsel %vm118, %v2431, 0
    %v2443 = vsel %vm118, %v2432, 0
    %2445 = vmatprep.subr.bf16.mxu0 %v2437
    %2446 = vmatpush1.bf16.msra.mxu0 %v2434
    %2447 = vmatprep.subr.bf16.mxu0 0
    %2448 = vmatpush1.bf16.msra.mxu0 0
    %2449 = vmatprep.subr.bf16.mxu0 0
    %2450 = vmatpush1.bf16.msra.mxu0 0
    %2451 = vmatprep.subr.bf16.mxu0 0
    %2452 = vmatpush1.bf16.msra.mxu0 0
    %2453 = vmatprep.subr.bf16.mxu0 0
    %2454 = vmatpush1.bf16.msra.mxu0 0
    %2455 = vmatprep.subr.bf16.mxu0 0
    %2456 = vmatpush1.bf16.msra.mxu0 0
    %2457 = vmatprep.subr.bf16.mxu0 0
    %2458 = vmatpush1.bf16.msra.mxu0 0
    %2459 = vmatprep.subr.bf16.mxu0 0
    %2460 = vmatpush1.bf16.msra.mxu0 0
    %2461 = vmatprep.subr.bf16.mxu0 0
    %2462 = vmatpush1.bf16.msra.mxu0 0
    %2463 = vmatprep.subr.bf16.mxu0 0
    %2464 = vmatpush1.bf16.msra.mxu0 0
    %2465 = vmatprep.subr.bf16.mxu0 0
    %2466 = vmatpush1.bf16.msra.mxu0 0
    %2467 = vmatprep.subr.bf16.mxu0 0
    %2468 = vmatpush1.bf16.msra.mxu0 0
    %2469 = vmatprep.subr.bf16.mxu0 0
    %2470 = vmatpush1.bf16.msra.mxu0 0
    %2471 = vmatprep.subr.bf16.mxu0 0
    %2472 = vmatpush1.bf16.msra.mxu0 0
    %2473 = vmatprep.subr.bf16.mxu0 0
    %2474 = vmatpush1.bf16.msra.mxu0 0
    %2475 = vmatprep.subr.bf16.mxu0 0
    %2476 = vmatpush1.bf16.msra.mxu0 0
    %2477 = vmatprep.mubr.bf16.mxu0 0
    %2478 = vmatmul.mubr.bf16.gmra.mrb[0].mxu0 %v116
    %v2479 = vpop.f32.mrb[0].mxu0
    %v2480 = vadd.f32 %v94, %v2479
    %v2481 = vpop.f32.mrb[0].mxu0
    %v2482 = vadd.f32 %v94, %v2481
    %v2483 = vpop.f32.mrb[0].mxu0
    %v2484 = vpop.f32.mrb[0].mxu0
    %2485 = vdwg.mxu0
    %2486 = vmatprep.subr.bf16.mxu0 %v2443
    %2487 = vmatpush1.bf16.msra.mxu0 %v2440
    %2488 = vmatprep.subr.bf16.mxu0 0
    %2489 = vmatpush1.bf16.msra.mxu0 0
    %2490 = vmatprep.subr.bf16.mxu0 0
    %2491 = vmatpush1.bf16.msra.mxu0 0
    %2492 = vmatprep.subr.bf16.mxu0 0
    %2493 = vmatpush1.bf16.msra.mxu0 0
    %2494 = vmatprep.subr.bf16.mxu0 0
    %2495 = vmatpush1.bf16.msra.mxu0 0
    %2496 = vmatprep.subr.bf16.mxu0 0
    %2497 = vmatpush1.bf16.msra.mxu0 0
    %2498 = vmatprep.subr.bf16.mxu0 0
    %2499 = vmatpush1.bf16.msra.mxu0 0
    %2500 = vmatprep.subr.bf16.mxu0 0
    %2501 = vmatpush1.bf16.msra.mxu0 0
    %2502 = vmatprep.subr.bf16.mxu0 0
    %2503 = vmatpush1.bf16.msra.mxu0 0
    %2504 = vmatprep.subr.bf16.mxu0 0
    %2505 = vmatpush1.bf16.msra.mxu0 0
    %2506 = vmatprep.subr.bf16.mxu0 0
    %2507 = vmatpush1.bf16.msra.mxu0 0
    %2508 = vmatprep.subr.bf16.mxu0 0
    %2509 = vmatpush1.bf16.msra.mxu0 0
    %2510 = vmatprep.subr.bf16.mxu0 0
    %2511 = vmatpush1.bf16.msra.mxu0 0
    %2512 = vmatprep.subr.bf16.mxu0 0
    %2513 = vmatpush1.bf16.msra.mxu0 0
    %2514 = vmatprep.subr.bf16.mxu0 0
    %2515 = vmatpush1.bf16.msra.mxu0 0
    %2516 = vmatprep.subr.bf16.mxu0 0
    %2517 = vmatpush1.bf16.msra.mxu0 0
    %2518 = vmatprep.mubr.bf16.mxu0 0
    %2519 = vmatmul.mubr.bf16.gmra.mrb[0].mxu0 %v116
    %v2520 = vpop.f32.mrb[0].mxu0
    %v2521 = vadd.f32 %v94, %v2520
    %v2522 = vpop.f32.mrb[0].mxu0
    %v2523 = vadd.f32 %v94, %v2522
    %v2524 = vpop.f32.mrb[0].mxu0
    %v2525 = vpop.f32.mrb[0].mxu0
    %2526 = vdwg.mxu0
    %v2527 = vmax.f32 %v2480, 0.0
    %v2528 = vmax.f32 %v2482, 0.0
    %v2529 = vmax.f32 %v2521, 0.0
    %v2530 = vmax.f32 %v2523, 0.0
    %v2531 = vpack.c.bf16 %v2527, %v2527
    %v2532 = vpack.c.bf16 %v2528, %v2528
    %v2533 = vpack.c.bf16 %v2529, %v2529
    %v2534 = vpack.c.bf16 %v2530, %v2530
    %v2536 = vsel %vm232, %v2531, 0
    %v2539 = vsel %vm232, %v2532, 0
    %v2542 = vsel %vm232, %v2533, 0
    %v2545 = vsel %vm232, %v2534, 0
    %2547 = vmatprep.subr.bf16.mxu0 %v2539
    %2548 = vmatpush1.bf16.msra.mxu0 %v2536
    %2549 = vmatprep.subr.bf16.mxu0 0
    %2550 = vmatpush1.bf16.msra.mxu0 0
    %2551 = vmatprep.subr.bf16.mxu0 0
    %2552 = vmatpush1.bf16.msra.mxu0 0
    %2553 = vmatprep.subr.bf16.mxu0 0
    %2554 = vmatpush1.bf16.msra.mxu0 0
    %2555 = vmatprep.subr.bf16.mxu0 0
    %2556 = vmatpush1.bf16.msra.mxu0 0
    %2557 = vmatprep.subr.bf16.mxu0 0
    %2558 = vmatpush1.bf16.msra.mxu0 0
    %2559 = vmatprep.subr.bf16.mxu0 0
    %2560 = vmatpush1.bf16.msra.mxu0 0
    %2561 = vmatprep.subr.bf16.mxu0 0
    %2562 = vmatpush1.bf16.msra.mxu0 0
    %2563 = vmatprep.subr.bf16.mxu0 0
    %2564 = vmatpush1.bf16.msra.mxu0 0
    %2565 = vmatprep.subr.bf16.mxu0 0
    %2566 = vmatpush1.bf16.msra.mxu0 0
    %2567 = vmatprep.subr.bf16.mxu0 0
    %2568 = vmatpush1.bf16.msra.mxu0 0
    %2569 = vmatprep.subr.bf16.mxu0 0
    %2570 = vmatpush1.bf16.msra.mxu0 0
    %2571 = vmatprep.subr.bf16.mxu0 0
    %2572 = vmatpush1.bf16.msra.mxu0 0
    %2573 = vmatprep.subr.bf16.mxu0 0
    %2574 = vmatpush1.bf16.msra.mxu0 0
    %2575 = vmatprep.subr.bf16.mxu0 0
    %2576 = vmatpush1.bf16.msra.mxu0 0
    %2577 = vmatprep.subr.bf16.mxu0 0
    %2578 = vmatpush1.bf16.msra.mxu0 0
    %2579 = vmatprep.mubr.bf16.mxu0 0
    %2580 = vmatmul.mubr.bf16.gmra.mrb[0].mxu0 %v230
    %v2581 = vpop.f32.mrb[0].mxu0
    %v2582 = vadd.f32 %v226, %v2581
    %v2583 = vpop.f32.mrb[0].mxu0
    %v2584 = vadd.f32 %v226, %v2583
    %v2585 = vpop.f32.mrb[0].mxu0
    %v2586 = vpop.f32.mrb[0].mxu0
    %2587 = vdwg.mxu0
    %2588 = vmatprep.subr.bf16.mxu0 %v2545
    %2589 = vmatpush1.bf16.msra.mxu0 %v2542
    %2590 = vmatprep.subr.bf16.mxu0 0
    %2591 = vmatpush1.bf16.msra.mxu0 0
    %2592 = vmatprep.subr.bf16.mxu0 0
    %2593 = vmatpush1.bf16.msra.mxu0 0
    %2594 = vmatprep.subr.bf16.mxu0 0
    %2595 = vmatpush1.bf16.msra.mxu0 0
    %2596 = vmatprep.subr.bf16.mxu0 0
    %2597 = vmatpush1.bf16.msra.mxu0 0
    %2598 = vmatprep.subr.bf16.mxu0 0
    %2599 = vmatpush1.bf16.msra.mxu0 0
    %2600 = vmatprep.subr.bf16.mxu0 0
    %2601 = vmatpush1.bf16.msra.mxu0 0
    %2602 = vmatprep.subr.bf16.mxu0 0
    %2603 = vmatpush1.bf16.msra.mxu0 0
    %2604 = vmatprep.subr.bf16.mxu0 0
    %2605 = vmatpush1.bf16.msra.mxu0 0
    %2606 = vmatprep.subr.bf16.mxu0 0
    %2607 = vmatpush1.bf16.msra.mxu0 0
    %2608 = vmatprep.subr.bf16.mxu0 0
    %2609 = vmatpush1.bf16.msra.mxu0 0
    %2610 = vmatprep.subr.bf16.mxu0 0
    %2611 = vmatpush1.bf16.msra.mxu0 0
    %2612 = vmatprep.subr.bf16.mxu0 0
    %2613 = vmatpush1.bf16.msra.mxu0 0
    %2614 = vmatprep.subr.bf16.mxu0 0
    %2615 = vmatpush1.bf16.msra.mxu0 0
    %2616 = vmatprep.subr.bf16.mxu0 0
    %2617 = vmatpush1.bf16.msra.mxu0 0
    %2618 = vmatprep.subr.bf16.mxu0 0
    %2619 = vmatpush1.bf16.msra.mxu0 0
    %2620 = vmatprep.mubr.bf16.mxu0 0
    %2621 = vmatmul.mubr.bf16.gmra.mrb[0].mxu0 %v230
    %v2622 = vpop.f32.mrb[0].mxu0
    %v2623 = vadd.f32 %v226, %v2622
    %v2624 = vpop.f32.mrb[0].mxu0
    %v2625 = vadd.f32 %v226, %v2624
    %v2626 = vpop.f32.mrb[0].mxu0
    %v2627 = vpop.f32.mrb[0].mxu0
    %2628 = vdwg.mxu0
    %v2629 = vpack.c.bf16 %v2582, %v2582
    %v2630 = vpack.c.bf16 %v2584, %v2584
    %v2631 = vpack.c.bf16 %v2623, %v2623
    %v2632 = vpack.c.bf16 %v2625, %v2625
    %v2761 = vunpack.c.l.b16 %v1497
    %v2762 = vunpack.c.h.b16 %v1497
    %v2763 = vunpack.c.l.b16 %v1498
    %v2764 = vunpack.c.h.b16 %v1498
    %v2765 = vunpack.c.l.b16 %v1499
    %v2766 = vunpack.c.h.b16 %v1499
    %v2767 = vunpack.c.l.b16 %v1500
    %v2768 = vunpack.c.h.b16 %v1500
    %v2769 = vunpack.c.l.b16 %v1501
    %v2770 = vunpack.c.h.b16 %v1501
    %v2771 = vunpack.c.l.b16 %v1502
    %v2772 = vunpack.c.h.b16 %v1502
    %v2773 = vunpack.c.l.b16 %v1503
    %v2774 = vunpack.c.h.b16 %v1503
    %v2775 = vunpack.c.l.b16 %v1504
    %v2776 = vunpack.c.h.b16 %v1504
    %v2777 = vunpack.c.l.b16 %v1505
    %v2778 = vunpack.c.h.b16 %v1505
    %v2779 = vunpack.c.l.b16 %v1506
    %v2780 = vunpack.c.h.b16 %v1506
    %v2781 = vunpack.c.l.b16 %v1507
    %v2782 = vunpack.c.h.b16 %v1507
    %v2783 = vunpack.c.l.b16 %v1508
    %v2784 = vunpack.c.h.b16 %v1508
    %v2785 = vunpack.c.l.b16 %v1509
    %v2786 = vunpack.c.h.b16 %v1509
    %v2787 = vunpack.c.l.b16 %v1510
    %v2788 = vunpack.c.h.b16 %v1510
    %v2789 = vunpack.c.l.b16 %v1511
    %v2790 = vunpack.c.h.b16 %v1511
    %v2791 = vunpack.c.l.b16 %v1512
    %v2792 = vunpack.c.h.b16 %v1512
    %v2793 = vunpack.c.l.b16 %v1513
    %v2794 = vunpack.c.h.b16 %v1513
    %v2795 = vunpack.c.l.b16 %v1514
    %v2796 = vunpack.c.h.b16 %v1514
    %v2797 = vunpack.c.l.b16 %v1515
    %v2798 = vunpack.c.h.b16 %v1515
    %v2799 = vunpack.c.l.b16 %v1516
    %v2800 = vunpack.c.h.b16 %v1516
    %v2801 = vunpack.c.l.b16 %v1517
    %v2802 = vunpack.c.h.b16 %v1517
    %v2803 = vunpack.c.l.b16 %v1518
    %v2804 = vunpack.c.h.b16 %v1518
    %v2805 = vunpack.c.l.b16 %v1519
    %v2806 = vunpack.c.h.b16 %v1519
    %v2807 = vunpack.c.l.b16 %v1520
    %v2808 = vunpack.c.h.b16 %v1520
    %v2809 = vunpack.c.l.b16 %v1521
    %v2810 = vunpack.c.h.b16 %v1521
    %v2811 = vunpack.c.l.b16 %v1522
    %v2812 = vunpack.c.h.b16 %v1522
    %v2813 = vunpack.c.l.b16 %v1523
    %v2814 = vunpack.c.h.b16 %v1523
    %v2815 = vunpack.c.l.b16 %v1524
    %v2816 = vunpack.c.h.b16 %v1524
    %v2817 = vunpack.c.l.b16 %v1525
    %v2818 = vunpack.c.h.b16 %v1525
    %v2819 = vunpack.c.l.b16 %v1526
    %v2820 = vunpack.c.h.b16 %v1526
    %v2821 = vunpack.c.l.b16 %v1527
    %v2822 = vunpack.c.h.b16 %v1527
    %v2823 = vunpack.c.l.b16 %v1528
    %v2824 = vunpack.c.h.b16 %v1528
    %v2825 = vunpack.c.l.b16 %v1529
    %v2826 = vunpack.c.h.b16 %v1529
    %v2827 = vunpack.c.l.b16 %v1530
    %v2828 = vunpack.c.h.b16 %v1530
    %v2829 = vunpack.c.l.b16 %v1531
    %v2830 = vunpack.c.h.b16 %v1531
    %v2831 = vunpack.c.l.b16 %v1532
    %v2832 = vunpack.c.h.b16 %v1532
    %v2833 = vunpack.c.l.b16 %v1533
    %v2834 = vunpack.c.h.b16 %v1533
    %v2835 = vunpack.c.l.b16 %v1534
    %v2836 = vunpack.c.h.b16 %v1534
    %v2837 = vunpack.c.l.b16 %v1535
    %v2838 = vunpack.c.h.b16 %v1535
    %v2839 = vunpack.c.l.b16 %v1536
    %v2840 = vunpack.c.h.b16 %v1536
    %v2841 = vunpack.c.l.b16 %v1537
    %v2842 = vunpack.c.h.b16 %v1537
    %v2843 = vunpack.c.l.b16 %v1538
    %v2844 = vunpack.c.h.b16 %v1538
    %v2845 = vunpack.c.l.b16 %v1539
    %v2846 = vunpack.c.h.b16 %v1539
    %v2847 = vunpack.c.l.b16 %v1540
    %v2848 = vunpack.c.h.b16 %v1540
    %v2849 = vunpack.c.l.b16 %v1541
    %v2850 = vunpack.c.h.b16 %v1541
    %v2851 = vunpack.c.l.b16 %v1542
    %v2852 = vunpack.c.h.b16 %v1542
    %v2853 = vunpack.c.l.b16 %v1543
    %v2854 = vunpack.c.h.b16 %v1543
    %v2855 = vunpack.c.l.b16 %v1544
    %v2856 = vunpack.c.h.b16 %v1544
    %v2857 = vunpack.c.l.b16 %v1545
    %v2858 = vunpack.c.h.b16 %v1545
    %v2859 = vunpack.c.l.b16 %v1546
    %v2860 = vunpack.c.h.b16 %v1546
    %v2861 = vunpack.c.l.b16 %v1547
    %v2862 = vunpack.c.h.b16 %v1547
    %v2863 = vunpack.c.l.b16 %v1548
    %v2864 = vunpack.c.h.b16 %v1548
    %v2865 = vunpack.c.l.b16 %v1549
    %v2866 = vunpack.c.h.b16 %v1549
    %v2867 = vunpack.c.l.b16 %v1550
    %v2868 = vunpack.c.h.b16 %v1550
    %v2869 = vunpack.c.l.b16 %v1551
    %v2870 = vunpack.c.h.b16 %v1551
    %v2871 = vunpack.c.l.b16 %v1552
    %v2872 = vunpack.c.h.b16 %v1552
    %v2873 = vunpack.c.l.b16 %v1553
    %v2874 = vunpack.c.h.b16 %v1553
    %v2875 = vunpack.c.l.b16 %v1554
    %v2876 = vunpack.c.h.b16 %v1554
    %v2877 = vunpack.c.l.b16 %v1555
    %v2878 = vunpack.c.h.b16 %v1555
    %v2879 = vunpack.c.l.b16 %v1556
    %v2880 = vunpack.c.h.b16 %v1556
    %v2881 = vunpack.c.l.b16 %v1557
    %v2882 = vunpack.c.h.b16 %v1557
    %v2883 = vunpack.c.l.b16 %v1558
    %v2884 = vunpack.c.h.b16 %v1558
    %v2885 = vunpack.c.l.b16 %v1559
    %v2886 = vunpack.c.h.b16 %v1559
    %v2887 = vunpack.c.l.b16 %v1560
    %v2888 = vunpack.c.h.b16 %v1560
    %v2889 = vunpack.c.l.b16 %v1561
    %v2890 = vunpack.c.h.b16 %v1561
    %v2891 = vunpack.c.l.b16 %v1562
    %v2892 = vunpack.c.h.b16 %v1562
    %v2893 = vunpack.c.l.b16 %v1563
    %v2894 = vunpack.c.h.b16 %v1563
    %v2895 = vunpack.c.l.b16 %v1564
    %v2896 = vunpack.c.h.b16 %v1564
    %v2897 = vunpack.c.l.b16 %v1565
    %v2898 = vunpack.c.h.b16 %v1565
    %v2899 = vunpack.c.l.b16 %v1566
    %v2900 = vunpack.c.h.b16 %v1566
    %v2901 = vunpack.c.l.b16 %v1567
    %v2902 = vunpack.c.h.b16 %v1567
    %v2903 = vunpack.c.l.b16 %v1568
    %v2904 = vunpack.c.h.b16 %v1568
    %v2905 = vunpack.c.l.b16 %v1569
    %v2906 = vunpack.c.h.b16 %v1569
    %v2907 = vunpack.c.l.b16 %v1570
    %v2908 = vunpack.c.h.b16 %v1570
    %v2909 = vunpack.c.l.b16 %v1571
    %v2910 = vunpack.c.h.b16 %v1571
    %v2911 = vunpack.c.l.b16 %v1572
    %v2912 = vunpack.c.h.b16 %v1572
    %v2913 = vunpack.c.l.b16 %v1573
    %v2914 = vunpack.c.h.b16 %v1573
    %v2915 = vunpack.c.l.b16 %v1574
    %v2916 = vunpack.c.h.b16 %v1574
    %v2917 = vunpack.c.l.b16 %v1575
    %v2918 = vunpack.c.h.b16 %v1575
    %v2919 = vunpack.c.l.b16 %v1576
    %v2920 = vunpack.c.h.b16 %v1576
    %v2921 = vunpack.c.l.b16 %v1577
    %v2922 = vunpack.c.h.b16 %v1577
    %v2923 = vunpack.c.l.b16 %v1578
    %v2924 = vunpack.c.h.b16 %v1578
    %v2925 = vunpack.c.l.b16 %v1579
    %v2926 = vunpack.c.h.b16 %v1579
    %v2927 = vunpack.c.l.b16 %v1580
    %v2928 = vunpack.c.h.b16 %v1580
    %v2929 = vunpack.c.l.b16 %v1581
    %v2930 = vunpack.c.h.b16 %v1581
    %v2931 = vunpack.c.l.b16 %v1582
    %v2932 = vunpack.c.h.b16 %v1582
    %v2933 = vunpack.c.l.b16 %v1583
    %v2934 = vunpack.c.h.b16 %v1583
    %v2935 = vunpack.c.l.b16 %v1584
    %v2936 = vunpack.c.h.b16 %v1584
    %v2937 = vunpack.c.l.b16 %v1585
    %v2938 = vunpack.c.h.b16 %v1585
    %v2939 = vunpack.c.l.b16 %v1586
    %v2940 = vunpack.c.h.b16 %v1586
    %v2941 = vunpack.c.l.b16 %v1587
    %v2942 = vunpack.c.h.b16 %v1587
    %v2943 = vunpack.c.l.b16 %v1588
    %v2944 = vunpack.c.h.b16 %v1588
    %v2945 = vunpack.c.l.b16 %v1589
    %v2946 = vunpack.c.h.b16 %v1589
    %v2947 = vunpack.c.l.b16 %v1590
    %v2948 = vunpack.c.h.b16 %v1590
    %v2949 = vunpack.c.l.b16 %v1591
    %v2950 = vunpack.c.h.b16 %v1591
    %v2951 = vunpack.c.l.b16 %v1592
    %v2952 = vunpack.c.h.b16 %v1592
    %v2953 = vunpack.c.l.b16 %v1593
    %v2954 = vunpack.c.h.b16 %v1593
    %v2955 = vunpack.c.l.b16 %v1594
    %v2956 = vunpack.c.h.b16 %v1594
    %v2957 = vunpack.c.l.b16 %v1595
    %v2958 = vunpack.c.h.b16 %v1595
    %v2959 = vunpack.c.l.b16 %v1596
    %v2960 = vunpack.c.h.b16 %v1596
    %v2961 = vunpack.c.l.b16 %v1597
    %v2962 = vunpack.c.h.b16 %v1597
    %v2963 = vunpack.c.l.b16 %v1598
    %v2964 = vunpack.c.h.b16 %v1598
    %v2965 = vunpack.c.l.b16 %v1599
    %v2966 = vunpack.c.h.b16 %v1599
    %v2967 = vunpack.c.l.b16 %v1600
    %v2968 = vunpack.c.h.b16 %v1600
    %v2969 = vunpack.c.l.b16 %v1601
    %v2970 = vunpack.c.h.b16 %v1601
    %v2971 = vunpack.c.l.b16 %v1602
    %v2972 = vunpack.c.h.b16 %v1602
    %v2973 = vunpack.c.l.b16 %v1603
    %v2974 = vunpack.c.h.b16 %v1603
    %v2975 = vunpack.c.l.b16 %v1604
    %v2976 = vunpack.c.h.b16 %v1604
    %v2977 = vunpack.c.l.b16 %v1605
    %v2978 = vunpack.c.h.b16 %v1605
    %v2979 = vunpack.c.l.b16 %v1606
    %v2980 = vunpack.c.h.b16 %v1606
    %v2981 = vunpack.c.l.b16 %v1607
    %v2982 = vunpack.c.h.b16 %v1607
    %v2983 = vunpack.c.l.b16 %v1608
    %v2984 = vunpack.c.h.b16 %v1608
    %v2985 = vunpack.c.l.b16 %v1609
    %v2986 = vunpack.c.h.b16 %v1609
    %v2987 = vunpack.c.l.b16 %v1610
    %v2988 = vunpack.c.h.b16 %v1610
    %v2989 = vunpack.c.l.b16 %v1611
    %v2990 = vunpack.c.h.b16 %v1611
    %v2991 = vunpack.c.l.b16 %v1612
    %v2992 = vunpack.c.h.b16 %v1612
    %v2993 = vunpack.c.l.b16 %v1613
    %v2994 = vunpack.c.h.b16 %v1613
    %v2995 = vunpack.c.l.b16 %v1614
    %v2996 = vunpack.c.h.b16 %v1614
    %v2997 = vunpack.c.l.b16 %v1615
    %v2998 = vunpack.c.h.b16 %v1615
    %v2999 = vunpack.c.l.b16 %v1616
    %v3000 = vunpack.c.h.b16 %v1616
    %v3001 = vunpack.c.l.b16 %v1617
    %v3002 = vunpack.c.h.b16 %v1617
    %v3003 = vunpack.c.l.b16 %v1618
    %v3004 = vunpack.c.h.b16 %v1618
    %v3005 = vunpack.c.l.b16 %v1619
    %v3006 = vunpack.c.h.b16 %v1619
    %v3007 = vunpack.c.l.b16 %v1620
    %v3008 = vunpack.c.h.b16 %v1620
    %v3009 = vunpack.c.l.b16 %v1621
    %v3010 = vunpack.c.h.b16 %v1621
    %v3011 = vunpack.c.l.b16 %v1622
    %v3012 = vunpack.c.h.b16 %v1622
    %v3013 = vunpack.c.l.b16 %v1623
    %v3014 = vunpack.c.h.b16 %v1623
    %v3015 = vunpack.c.l.b16 %v1624
    %v3016 = vunpack.c.h.b16 %v1624
    %v3017 = vpack.c.b16 %v2765, %v2761
    %v3018 = vpack.c.b16 %v2766, %v2762
    %v3019 = vpack.c.b16 %v2767, %v2763
    %v3020 = vpack.c.b16 %v2768, %v2764
    %v3021 = vpack.c.b16 %v2773, %v2769
    %v3022 = vpack.c.b16 %v2774, %v2770
    %v3023 = vpack.c.b16 %v2775, %v2771
    %v3024 = vpack.c.b16 %v2776, %v2772
    %v3025 = vpack.c.b16 %v2781, %v2777
    %v3026 = vpack.c.b16 %v2782, %v2778
    %v3027 = vpack.c.b16 %v2783, %v2779
    %v3028 = vpack.c.b16 %v2784, %v2780
    %v3029 = vpack.c.b16 %v2789, %v2785
    %v3030 = vpack.c.b16 %v2790, %v2786
    %v3031 = vpack.c.b16 %v2791, %v2787
    %v3032 = vpack.c.b16 %v2792, %v2788
    %v3033 = vpack.c.b16 %v2797, %v2793
    %v3034 = vpack.c.b16 %v2798, %v2794
    %v3035 = vpack.c.b16 %v2799, %v2795
    %v3036 = vpack.c.b16 %v2800, %v2796
    %v3037 = vpack.c.b16 %v2805, %v2801
    %v3038 = vpack.c.b16 %v2806, %v2802
    %v3039 = vpack.c.b16 %v2807, %v2803
    %v3040 = vpack.c.b16 %v2808, %v2804
    %v3041 = vpack.c.b16 %v2813, %v2809
    %v3042 = vpack.c.b16 %v2814, %v2810
    %v3043 = vpack.c.b16 %v2815, %v2811
    %v3044 = vpack.c.b16 %v2816, %v2812
    %v3045 = vpack.c.b16 %v2821, %v2817
    %v3046 = vpack.c.b16 %v2822, %v2818
    %v3047 = vpack.c.b16 %v2823, %v2819
    %v3048 = vpack.c.b16 %v2824, %v2820
    %v3049 = vpack.c.b16 %v2829, %v2825
    %v3050 = vpack.c.b16 %v2830, %v2826
    %v3051 = vpack.c.b16 %v2831, %v2827
    %v3052 = vpack.c.b16 %v2832, %v2828
    %v3053 = vpack.c.b16 %v2837, %v2833
    %v3054 = vpack.c.b16 %v2838, %v2834
    %v3055 = vpack.c.b16 %v2839, %v2835
    %v3056 = vpack.c.b16 %v2840, %v2836
    %v3057 = vpack.c.b16 %v2845, %v2841
    %v3058 = vpack.c.b16 %v2846, %v2842
    %v3059 = vpack.c.b16 %v2847, %v2843
    %v3060 = vpack.c.b16 %v2848, %v2844
    %v3061 = vpack.c.b16 %v2853, %v2849
    %v3062 = vpack.c.b16 %v2854, %v2850
    %v3063 = vpack.c.b16 %v2855, %v2851
    %v3064 = vpack.c.b16 %v2856, %v2852
    %v3065 = vpack.c.b16 %v2861, %v2857
    %v3066 = vpack.c.b16 %v2862, %v2858
    %v3067 = vpack.c.b16 %v2863, %v2859
    %v3068 = vpack.c.b16 %v2864, %v2860
    %v3069 = vpack.c.b16 %v2869, %v2865
    %v3070 = vpack.c.b16 %v2870, %v2866
    %v3071 = vpack.c.b16 %v2871, %v2867
    %v3072 = vpack.c.b16 %v2872, %v2868
    %v3073 = vpack.c.b16 %v2877, %v2873
    %v3074 = vpack.c.b16 %v2878, %v2874
    %v3075 = vpack.c.b16 %v2879, %v2875
    %v3076 = vpack.c.b16 %v2880, %v2876
    %v3077 = vpack.c.b16 %v2885, %v2881
    %v3078 = vpack.c.b16 %v2886, %v2882
    %v3079 = vpack.c.b16 %v2887, %v2883
    %v3080 = vpack.c.b16 %v2888, %v2884
    %v3081 = vpack.c.b16 %v2893, %v2889
    %v3082 = vpack.c.b16 %v2894, %v2890
    %v3083 = vpack.c.b16 %v2895, %v2891
    %v3084 = vpack.c.b16 %v2896, %v2892
    %v3085 = vpack.c.b16 %v2901, %v2897
    %v3086 = vpack.c.b16 %v2902, %v2898
    %v3087 = vpack.c.b16 %v2903, %v2899
    %v3088 = vpack.c.b16 %v2904, %v2900
    %v3089 = vpack.c.b16 %v2909, %v2905
    %v3090 = vpack.c.b16 %v2910, %v2906
    %v3091 = vpack.c.b16 %v2911, %v2907
    %v3092 = vpack.c.b16 %v2912, %v2908
    %v3093 = vpack.c.b16 %v2917, %v2913
    %v3094 = vpack.c.b16 %v2918, %v2914
    %v3095 = vpack.c.b16 %v2919, %v2915
    %v3096 = vpack.c.b16 %v2920, %v2916
    %v3097 = vpack.c.b16 %v2925, %v2921
    %v3098 = vpack.c.b16 %v2926, %v2922
    %v3099 = vpack.c.b16 %v2927, %v2923
    %v3100 = vpack.c.b16 %v2928, %v2924
    %v3101 = vpack.c.b16 %v2933, %v2929
    %v3102 = vpack.c.b16 %v2934, %v2930
    %v3103 = vpack.c.b16 %v2935, %v2931
    %v3104 = vpack.c.b16 %v2936, %v2932
    %v3105 = vpack.c.b16 %v2941, %v2937
    %v3106 = vpack.c.b16 %v2942, %v2938
    %v3107 = vpack.c.b16 %v2943, %v2939
    %v3108 = vpack.c.b16 %v2944, %v2940
    %v3109 = vpack.c.b16 %v2949, %v2945
    %v3110 = vpack.c.b16 %v2950, %v2946
    %v3111 = vpack.c.b16 %v2951, %v2947
    %v3112 = vpack.c.b16 %v2952, %v2948
    %v3113 = vpack.c.b16 %v2957, %v2953
    %v3114 = vpack.c.b16 %v2958, %v2954
    %v3115 = vpack.c.b16 %v2959, %v2955
    %v3116 = vpack.c.b16 %v2960, %v2956
    %v3117 = vpack.c.b16 %v2965, %v2961
    %v3118 = vpack.c.b16 %v2966, %v2962
    %v3119 = vpack.c.b16 %v2967, %v2963
    %v3120 = vpack.c.b16 %v2968, %v2964
    %v3121 = vpack.c.b16 %v2973, %v2969
    %v3122 = vpack.c.b16 %v2974, %v2970
    %v3123 = vpack.c.b16 %v2975, %v2971
    %v3124 = vpack.c.b16 %v2976, %v2972
    %v3125 = vpack.c.b16 %v2981, %v2977
    %v3126 = vpack.c.b16 %v2982, %v2978
    %v3127 = vpack.c.b16 %v2983, %v2979
    %v3128 = vpack.c.b16 %v2984, %v2980
    %v3129 = vpack.c.b16 %v2989, %v2985
    %v3130 = vpack.c.b16 %v2990, %v2986
    %v3131 = vpack.c.b16 %v2991, %v2987
    %v3132 = vpack.c.b16 %v2992, %v2988
    %v3133 = vpack.c.b16 %v2997, %v2993
    %v3134 = vpack.c.b16 %v2998, %v2994
    %v3135 = vpack.c.b16 %v2999, %v2995
    %v3136 = vpack.c.b16 %v3000, %v2996
    %v3137 = vpack.c.b16 %v3005, %v3001
    %v3138 = vpack.c.b16 %v3006, %v3002
    %v3139 = vpack.c.b16 %v3007, %v3003
    %v3140 = vpack.c.b16 %v3008, %v3004
    %v3141 = vpack.c.b16 %v3013, %v3009
    %v3142 = vpack.c.b16 %v3014, %v3010
    %v3143 = vpack.c.b16 %v3015, %v3011
    %v3144 = vpack.c.b16 %v3016, %v3012
    %3273 = vmatprep.subr.bf16.mxu0 %v3018
    %3274 = vmatpush1.bf16.msra.mxu0 %v3017
    %3275 = vmatprep.subr.bf16.mxu0 %v3022
    %3276 = vmatpush1.bf16.msra.mxu0 %v3021
    %3277 = vmatprep.subr.bf16.mxu0 %v3026
    %3278 = vmatpush1.bf16.msra.mxu0 %v3025
    %3279 = vmatprep.subr.bf16.mxu0 %v3030
    %3280 = vmatpush1.bf16.msra.mxu0 %v3029
    %3281 = vmatprep.subr.bf16.mxu0 %v3034
    %3282 = vmatpush1.bf16.msra.mxu0 %v3033
    %3283 = vmatprep.subr.bf16.mxu0 %v3038
    %3284 = vmatpush1.bf16.msra.mxu0 %v3037
    %3285 = vmatprep.subr.bf16.mxu0 %v3042
    %3286 = vmatpush1.bf16.msra.mxu0 %v3041
    %3287 = vmatprep.subr.bf16.mxu0 %v3046
    %3288 = vmatpush1.bf16.msra.mxu0 %v3045
    %3289 = vmatprep.subr.bf16.mxu0 %v3050
    %3290 = vmatpush1.bf16.msra.mxu0 %v3049
    %3291 = vmatprep.subr.bf16.mxu0 %v3054
    %3292 = vmatpush1.bf16.msra.mxu0 %v3053
    %3293 = vmatprep.subr.bf16.mxu0 %v3058
    %3294 = vmatpush1.bf16.msra.mxu0 %v3057
    %3295 = vmatprep.subr.bf16.mxu0 %v3062
    %3296 = vmatpush1.bf16.msra.mxu0 %v3061
    %3297 = vmatprep.subr.bf16.mxu0 %v3066
    %3298 = vmatpush1.bf16.msra.mxu0 %v3065
    %3299 = vmatprep.subr.bf16.mxu0 %v3070
    %3300 = vmatpush1.bf16.msra.mxu0 %v3069
    %3301 = vmatprep.subr.bf16.mxu0 %v3074
    %3302 = vmatpush1.bf16.msra.mxu0 %v3073
    %3303 = vmatprep.subr.bf16.mxu0 %v3078
    %3304 = vmatpush1.bf16.msra.mxu0 %v3077
    %3305 = vmatprep.mubr.bf16.mxu0 %v2630
    %3306 = vmatmul.mubr.bf16.gmra.mrb[0].mxu0 %v2629
    %v3307 = vpop.f32.mrb[0].mxu0
    %v3308 = vadd.f32 0.0, %v3307
    %v3309 = vpop.f32.mrb[0].mxu0
    %v3310 = vadd.f32 0.0, %v3309
    %v3311 = vpop.f32.mrb[0].mxu0
    %v3312 = vpop.f32.mrb[0].mxu0
    %3313 = vdwg.mxu0
    %3314 = vmatprep.subr.bf16.mxu0 %v3082
    %3315 = vmatpush1.bf16.msra.mxu0 %v3081
    %3316 = vmatprep.subr.bf16.mxu0 %v3086
    %3317 = vmatpush1.bf16.msra.mxu0 %v3085
    %3318 = vmatprep.subr.bf16.mxu0 %v3090
    %3319 = vmatpush1.bf16.msra.mxu0 %v3089
    %3320 = vmatprep.subr.bf16.mxu0 %v3094
    %3321 = vmatpush1.bf16.msra.mxu0 %v3093
    %3322 = vmatprep.subr.bf16.mxu0 %v3098
    %3323 = vmatpush1.bf16.msra.mxu0 %v3097
    %3324 = vmatprep.subr.bf16.mxu0 %v3102
    %3325 = vmatpush1.bf16.msra.mxu0 %v3101
    %3326 = vmatprep.subr.bf16.mxu0 %v3106
    %3327 = vmatpush1.bf16.msra.mxu0 %v3105
    %3328 = vmatprep.subr.bf16.mxu0 %v3110
    %3329 = vmatpush1.bf16.msra.mxu0 %v3109
    %3330 = vmatprep.subr.bf16.mxu0 %v3114
    %3331 = vmatpush1.bf16.msra.mxu0 %v3113
    %3332 = vmatprep.subr.bf16.mxu0 %v3118
    %3333 = vmatpush1.bf16.msra.mxu0 %v3117
    %3334 = vmatprep.subr.bf16.mxu0 %v3122
    %3335 = vmatpush1.bf16.msra.mxu0 %v3121
    %3336 = vmatprep.subr.bf16.mxu0 %v3126
    %3337 = vmatpush1.bf16.msra.mxu0 %v3125
    %3338 = vmatprep.subr.bf16.mxu0 %v3130
    %3339 = vmatpush1.bf16.msra.mxu0 %v3129
    %3340 = vmatprep.subr.bf16.mxu0 %v3134
    %3341 = vmatpush1.bf16.msra.mxu0 %v3133
    %3342 = vmatprep.subr.bf16.mxu0 %v3138
    %3343 = vmatpush1.bf16.msra.mxu0 %v3137
    %3344 = vmatprep.subr.bf16.mxu0 %v3142
    %3345 = vmatpush1.bf16.msra.mxu0 %v3141
    %3346 = vmatprep.mubr.bf16.mxu0 %v2632
    %3347 = vmatmul.mubr.bf16.gmra.mrb[0].mxu0 %v2631
    %v3348 = vpop.f32.mrb[0].mxu0
    %v3349 = vadd.f32 %v3308, %v3348
    %v3350 = vpop.f32.mrb[0].mxu0
    %v3351 = vadd.f32 %v3310, %v3350
    %v3352 = vpop.f32.mrb[0].mxu0
    %v3353 = vpop.f32.mrb[0].mxu0
    %3354 = vdwg.mxu0
    %3355 = vmatprep.subr.bf16.mxu0 %v3020
    %3356 = vmatpush1.bf16.msra.mxu0 %v3019
    %3357 = vmatprep.subr.bf16.mxu0 %v3024
    %3358 = vmatpush1.bf16.msra.mxu0 %v3023
    %3359 = vmatprep.subr.bf16.mxu0 %v3028
    %3360 = vmatpush1.bf16.msra.mxu0 %v3027
    %3361 = vmatprep.subr.bf16.mxu0 %v3032
    %3362 = vmatpush1.bf16.msra.mxu0 %v3031
    %3363 = vmatprep.subr.bf16.mxu0 %v3036
    %3364 = vmatpush1.bf16.msra.mxu0 %v3035
    %3365 = vmatprep.subr.bf16.mxu0 %v3040
    %3366 = vmatpush1.bf16.msra.mxu0 %v3039
    %3367 = vmatprep.subr.bf16.mxu0 %v3044
    %3368 = vmatpush1.bf16.msra.mxu0 %v3043
    %3369 = vmatprep.subr.bf16.mxu0 %v3048
    %3370 = vmatpush1.bf16.msra.mxu0 %v3047
    %3371 = vmatprep.subr.bf16.mxu0 %v3052
    %3372 = vmatpush1.bf16.msra.mxu0 %v3051
    %3373 = vmatprep.subr.bf16.mxu0 %v3056
    %3374 = vmatpush1.bf16.msra.mxu0 %v3055
    %3375 = vmatprep.subr.bf16.mxu0 %v3060
    %3376 = vmatpush1.bf16.msra.mxu0 %v3059
    %3377 = vmatprep.subr.bf16.mxu0 %v3064
    %3378 = vmatpush1.bf16.msra.mxu0 %v3063
    %3379 = vmatprep.subr.bf16.mxu0 %v3068
    %3380 = vmatpush1.bf16.msra.mxu0 %v3067
    %3381 = vmatprep.subr.bf16.mxu0 %v3072
    %3382 = vmatpush1.bf16.msra.mxu0 %v3071
    %3383 = vmatprep.subr.bf16.mxu0 %v3076
    %3384 = vmatpush1.bf16.msra.mxu0 %v3075
    %3385 = vmatprep.subr.bf16.mxu0 %v3080
    %3386 = vmatpush1.bf16.msra.mxu0 %v3079
    %3387 = vmatprep.mubr.bf16.mxu0 %v2630
    %3388 = vmatmul.mubr.bf16.gmra.mrb[0].mxu0 %v2629
    %v3389 = vpop.f32.mrb[0].mxu0
    %v3390 = vadd.f32 0.0, %v3389
    %v3391 = vpop.f32.mrb[0].mxu0
    %v3392 = vadd.f32 0.0, %v3391
    %v3393 = vpop.f32.mrb[0].mxu0
    %v3394 = vpop.f32.mrb[0].mxu0
    %3395 = vdwg.mxu0
    %3396 = vmatprep.subr.bf16.mxu0 %v3084
    %3397 = vmatpush1.bf16.msra.mxu0 %v3083
    %3398 = vmatprep.subr.bf16.mxu0 %v3088
    %3399 = vmatpush1.bf16.msra.mxu0 %v3087
    %3400 = vmatprep.subr.bf16.mxu0 %v3092
    %3401 = vmatpush1.bf16.msra.mxu0 %v3091
    %3402 = vmatprep.subr.bf16.mxu0 %v3096
    %3403 = vmatpush1.bf16.msra.mxu0 %v3095
    %3404 = vmatprep.subr.bf16.mxu0 %v3100
    %3405 = vmatpush1.bf16.msra.mxu0 %v3099
    %3406 = vmatprep.subr.bf16.mxu0 %v3104
    %3407 = vmatpush1.bf16.msra.mxu0 %v3103
    %3408 = vmatprep.subr.bf16.mxu0 %v3108
    %3409 = vmatpush1.bf16.msra.mxu0 %v3107
    %3410 = vmatprep.subr.bf16.mxu0 %v3112
    %3411 = vmatpush1.bf16.msra.mxu0 %v3111
    %3412 = vmatprep.subr.bf16.mxu0 %v3116
    %3413 = vmatpush1.bf16.msra.mxu0 %v3115
    %3414 = vmatprep.subr.bf16.mxu0 %v3120
    %3415 = vmatpush1.bf16.msra.mxu0 %v3119
    %3416 = vmatprep.subr.bf16.mxu0 %v3124
    %3417 = vmatpush1.bf16.msra.mxu0 %v3123
    %3418 = vmatprep.subr.bf16.mxu0 %v3128
    %3419 = vmatpush1.bf16.msra.mxu0 %v3127
    %3420 = vmatprep.subr.bf16.mxu0 %v3132
    %3421 = vmatpush1.bf16.msra.mxu0 %v3131
    %3422 = vmatprep.subr.bf16.mxu0 %v3136
    %3423 = vmatpush1.bf16.msra.mxu0 %v3135
    %3424 = vmatprep.subr.bf16.mxu0 %v3140
    %3425 = vmatpush1.bf16.msra.mxu0 %v3139
    %3426 = vmatprep.subr.bf16.mxu0 %v3144
    %3427 = vmatpush1.bf16.msra.mxu0 %v3143
    %3428 = vmatprep.mubr.bf16.mxu0 %v2632
    %3429 = vmatmul.mubr.bf16.gmra.mrb[0].mxu0 %v2631
    %v3430 = vpop.f32.mrb[0].mxu0
    %v3431 = vadd.f32 %v3390, %v3430
    %v3432 = vpop.f32.mrb[0].mxu0
    %v3433 = vadd.f32 %v3392, %v3432
    %v3434 = vpop.f32.mrb[0].mxu0
    %v3435 = vpop.f32.mrb[0].mxu0
    %3436 = vdwg.mxu0
    %v3437 = vmax.f32 %v1365, %v3349
    %v3438 = vmax.f32 %v1366, %v3351
    %v3439 = vmax.f32 %v1367, %v3431
    %v3440 = vmax.f32 %v1368, %v3433
    %3441 = vst [vmem:[%s9] sm:$0x1f] %v3437
    %3442 = vst [vmem:[%s9 + $0x8] sm:$0x1f] %v3438
    %3443 = vst [vmem:[%s9 + $0x10] sm:$0x1f] %v3439
    %3444 = vst [vmem:[%s9 + $0x18] sm:$0x1f] %v3440
    // Predicated region
    $region54: #{tpu_custom_call.1} parent=1 // pred_check
      _
    $region55: #{tpu_custom_call.1} parent=1 // pred_check_branch
      %3446 = sbr.rel (0) target = $region57
    $region56: #{tpu_custom_call.1} parent=1 // pred_region
      _
    $region57: #{tpu_custom_call.1} parent=1 // pred_fallthru
      _
    // Predicated region
    $region58: #{tpu_custom_call.1} parent=1 // pred_check
      _
    $region59: #{tpu_custom_call.1} parent=1 // pred_check_branch
      %3448 = sbr.rel (0) target = $region61
    $region60: #{tpu_custom_call.1} parent=1 // pred_region
      _
    $region61: #{tpu_custom_call.1} parent=1 // pred_fallthru
      _
    %3449 = vsyncpa [#allocation3], 1
    %3450 = vsyncpa [#allocation5], 1
    %3451 = vsyncpa [#allocation8], 1

</llo_original>
